<compile_context>
chip_gen: v7x
topology: tpu7x:2x2x1
jax: 0.10.0
libtpu: 0.0.40
codegen_flags: <defaults>
</compile_context>

<pallas_src>
import jax
import jax.numpy as jnp
from jax.experimental import pallas as pl
from jax.experimental.pallas import tpu as pltpu

LANE = 128  # pad every feature dim to a full lane width


def _vmem_spec():
    return pl.BlockSpec(memory_space=pltpu.MemorySpace.VMEM)


# -----------------------------------------------------------------------------
# Fused kernel: 3 message-passing layers + mean pool + fc1/ReLU + fc2
# -----------------------------------------------------------------------------
def cegnet_kernel(src_ref, dst_ref, batch_ref, x_ref, ea_ref,
                  anode_ref, aedge_ref, bmsg_ref, unode_ref, wupd_ref, bupd_ref,
                  w1_ref, b1_ref, w2_ref, b2_ref,
                  out_ref):
    f32 = jnp.float32
    E = ea_ref.shape[0]
    N = x_ref.shape[0]
    B = out_ref.shape[0]

    # Selector matrices built in-kernel (never touch HBM):
    #   gather[e, n]  = (src[e] == n)   -> x_j  = gather @ x        (gather x[src])
    #   scatter[n, e] = (dst[e] == n)   -> aggr = scatter @ msg     (scatter-add on dst)
    #   pool01[b, n]  = (batch[n] == b) -> mean = (pool01 @ h) * inv_counts
    gather = (jax.lax.broadcasted_iota(jnp.int32, (E, N), 1) == src_ref[...]).astype(f32)
    scatter = (jax.lax.broadcasted_iota(jnp.int32, (N, E), 0) == dst_ref[...]).astype(f32)
    pool01 = (jax.lax.broadcasted_iota(jnp.int32, (B, N), 0) == batch_ref[...]).astype(f32)
    inv_counts = 1.0 / jnp.maximum(jnp.sum(pool01, axis=1, keepdims=True), 1.0)

    ea = ea_ref[...]
    h = x_ref[...]
    for l in range(3):  # three CEGMessagePassing layers, unrolled; h stays VMEM-resident
        # message_mlp (folded):  msg = ReLU( gather @ (h @ Anode) + ea @ Aedge + bmsg )
        # (project N node rows first, then gather to E edges — exact reassociation)
        node_proj = jnp.dot(h, anode_ref[l], preferred_element_type=f32)        # (N, F)
        edge_proj = jnp.dot(ea, aedge_ref[l], preferred_element_type=f32)       # (E, F)
        msg = jnp.maximum(
            jnp.dot(gather, node_proj, preferred_element_type=f32)
            + edge_proj + bmsg_ref[l], 0.0)                                     # (E, F)
        # aggr='add' on destination nodes
        aggr = jnp.dot(scatter, msg, preferred_element_type=f32)                # (N, F)
        # update_mlp (folded):  h = ReLU( h @ Unode + aggr @ Wupd + bupd )
        h = jnp.maximum(
            jnp.dot(h, unode_ref[l], preferred_element_type=f32)
            + jnp.dot(aggr, wupd_ref[l], preferred_element_type=f32)
            + bupd_ref[l], 0.0)
        # TODO(synk): nn.Dropout between layers is identity in eval mode; not modeled.

    pooled = jnp.dot(pool01, h, preferred_element_type=f32) * inv_counts        # global_mean_pool
    hid = jnp.maximum(jnp.dot(pooled, w1_ref[...], preferred_element_type=f32)
                      + b1_ref[...], 0.0)                                       # ReLU(fc1)
    out_ref[...] = (jnp.dot(hid, w2_ref[...], preferred_element_type=f32)
                    + b2_ref[...])                                              # fc2 -> lane-dense slab


# -----------------------------------------------------------------------------
# Host-side parameter construction: PyTorch-shaped Linears, folded + lane-padded
# -----------------------------------------------------------------------------
def _pad2(a, rows, cols):
    return jnp.zeros((rows, cols), a.dtype).at[: a.shape[0], : a.shape[1]].set(a)


def _pad_bias(b, cols):
    return jnp.zeros((1, cols), b.dtype).at[0, : b.shape[0]].set(b)


def init_linear(key, fan_in, fan_out):
    # PyTorch nn.Linear default init: U(-1/sqrt(fan_in), 1/sqrt(fan_in)).
    kw, kb = jax.random.split(key)
    bound = 1.0 / (fan_in ** 0.5)
    W = jax.random.uniform(kw, (fan_in, fan_out), jnp.float32, -bound, bound)
    b = jax.random.uniform(kb, (fan_out,), jnp.float32, -bound, bound)
    return W, b


def fold_mp_layer(key, node_in, edge_in, hidden):
    """One CEGMessagePassing layer, with the no-nonlinearity Linear chains composed."""
    ks = jax.random.split(key, 5)
    Ws, bs = init_linear(ks[0], node_in, hidden)          # sender_node_lin
    We, be = init_linear(ks[1], edge_in, hidden)          # edge_lin
    Wm, bm = init_linear(ks[2], 2 * hidden, hidden)       # message_mlp Linear
    Wu, bu = init_linear(ks[3], node_in, hidden)          # update_x_lin
    Wup, bup = init_linear(ks[4], 2 * hidden, hidden)     # update_mlp Linear
    # torch.cat order: message -> cat([node_part, edge_part]); update -> cat([old_x, aggr])
    Wm1, Wm2 = Wm[:hidden], Wm[hidden:]
    Wup1, Wup2 = Wup[:hidden], Wup[hidden:]
    return dict(
        Anode=Ws @ Wm1, Aedge=We @ Wm2, bmsg=bs @ Wm1 + be @ Wm2 + bm,
        Unode=Wu @ Wup1, Wupd=Wup2, bupd=bu @ Wup1 + bup)


def init_cegnet(key, node_in, edge_in, hidden, output_dim):
    ks = jax.random.split(key, 5)
    layers = [fold_mp_layer(ks[0], node_in, edge_in, hidden),
              fold_mp_layer(ks[1], hidden, edge_in, hidden),
              fold_mp_layer(ks[2], hidden, edge_in, hidden)]
    W1, b1 = init_linear(ks[3], hidden, hidden // 2)      # fc1
    W2, b2 = init_linear(ks[4], hidden // 2, output_dim)  # fc2

    # Zero-pad all feature dims to LANE and stack the 3 layers -> lane-dense matmuls,
    # unmasked stores.  Padding is exact: zero weights/biases propagate zeros everywhere.
    def stk(name):
        return jnp.stack([_pad2(l[name], LANE, LANE) for l in layers])

    def stk_b(name):
        return jnp.stack([_pad_bias(l[name], LANE) for l in layers])

    return dict(
        Anode=stk("Anode"), Aedge=stk("Aedge"), bmsg=stk_b("bmsg"),
        Unode=stk("Unode"), Wupd=stk("Wupd"), bupd=stk_b("bupd"),
        W1=_pad2(W1, LANE, LANE), b1=_pad_bias(b1, LANE),
        W2=_pad2(W2, LANE, LANE), b2=_pad_bias(b2, LANE))


# -----------------------------------------------------------------------------
# CEGNet forward: one fused pallas_call
# -----------------------------------------------------------------------------
def cegnet_forward(params, x, edge_index, edge_attr, batch, num_graphs, output_dim):
    N = x.shape[0]
    E = edge_attr.shape[0]
    B = num_graphs

    x_p = _pad2(x, N, LANE)
    ea_p = _pad2(edge_attr, E, LANE)
    src = edge_index[0].astype(jnp.int32).reshape(E, 1)
    dst = edge_index[1].astype(jnp.int32).reshape(1, E)
    bat = batch.astype(jnp.int32).reshape(1, N)

    args = (src, dst, bat, x_p, ea_p,
            params["Anode"], params["Aedge"], params["bmsg"],
            params["Unode"], params["Wupd"], params["bupd"],
            params["W1"], params["b1"], params["W2"], params["b2"])

    out_pad = pl.pallas_call(
        cegnet_kernel,
        out_shape=jax.ShapeDtypeStruct((B, LANE), jnp.float32),
        in_specs=[_vmem_spec() for _ in args],
        out_specs=_vmem_spec(),
    )(*args)

    out = out_pad[:, :output_dim]
    return out[:, 0] if output_dim == 1 else out   # matches torch .squeeze(-1)


# -----------------------------------------------------------------------------
# Pure-JAX reference (same folded math, segment-sum based) for a sanity check
# -----------------------------------------------------------------------------
def cegnet_reference(params, x, edge_index, edge_attr, batch, num_graphs, output_dim):
    N = x.shape[0]
    E = edge_attr.shape[0]
    B = num_graphs
    h = _pad2(x, N, LANE)
    ea = _pad2(edge_attr, E, LANE)
    src = edge_index[0]
    dst = edge_index[1]
    for l in range(3):
        xj = h[src]
        msg = jax.nn.relu(xj @ params["Anode"][l] + ea @ params["Aedge"][l]
                          + params["bmsg"][l])
        aggr = jax.ops.segment_sum(msg, dst, num_segments=N)
        h = jax.nn.relu(h @ params["Unode"][l] + aggr @ params["Wupd"][l]
                        + params["bupd"][l])
    sums = jax.ops.segment_sum(h, batch, num_segments=B)
    counts = jnp.maximum(
        jax.ops.segment_sum(jnp.ones((N,), jnp.float32), batch, num_segments=B), 1.0)
    pooled = sums / counts[:, None]
    hid = jax.nn.relu(pooled @ params["W1"] + params["b1"])
    out = (hid @ params["W2"] + params["b2"])[:, :output_dim]
    return out[:, 0] if output_dim == 1 else out


# -----------------------------------------------------------------------------
# Main
# -----------------------------------------------------------------------------
if __name__ == "__main__":
    NODE_IN, EDGE_IN, HIDDEN, OUT_DIM = 8, 4, 32, 1
    N_NODES, N_EDGES, N_GRAPHS = 16, 32, 2

    key = jax.random.PRNGKey(0)
    k_par, k_x, k_ea, k_src, k_dst = jax.random.split(key, 5)

    params = init_cegnet(k_par, NODE_IN, EDGE_IN, HIDDEN, OUT_DIM)

    x = jax.random.normal(k_x, (N_NODES, NODE_IN), dtype=jnp.float32)
    edge_attr = jax.random.normal(k_ea, (N_EDGES, EDGE_IN), dtype=jnp.float32)
    src = jax.random.randint(k_src, (N_EDGES,), 0, N_NODES)
    dst = jax.random.randint(k_dst, (N_EDGES,), 0, N_NODES)
    edge_index = jnp.stack([src, dst], axis=0)                       # (2, E)
    batch = jnp.concatenate([jnp.zeros(N_NODES // 2, jnp.int32),
                             jnp.ones(N_NODES - N_NODES // 2, jnp.int32)])

    fwd = jax.jit(lambda p, x_, ei, ea, b:
                  cegnet_forward(p, x_, ei, ea, b, N_GRAPHS, OUT_DIM))
    out = jax.block_until_ready(fwd(params, x, edge_index, edge_attr, batch))

    ref = cegnet_reference(params, x, edge_index, edge_attr, batch, N_GRAPHS, OUT_DIM)

    assert out.shape == (N_GRAPHS,), out.shape
    assert bool(jnp.all(jnp.isfinite(out)))
    assert bool(jnp.allclose(out, ref, rtol=5e-2, atol=5e-2)), (out, ref)
    print("KERNEL_OK")
</pallas_src>

<mosaic_0001>
module attributes {stable_mosaic.version = 11 : i64} {
  func.func @cegnet_kernel(%arg0: memref<32x1xi32, #tpu.memory_space<vmem>>, %arg1: memref<1x32xi32, #tpu.memory_space<vmem>>, %arg2: memref<1x16xi32, #tpu.memory_space<vmem>>, %arg3: memref<16x128xf32, #tpu.memory_space<vmem>>, %arg4: memref<32x128xf32, #tpu.memory_space<vmem>>, %arg5: memref<3x128x128xf32, #tpu.memory_space<vmem>>, %arg6: memref<3x128x128xf32, #tpu.memory_space<vmem>>, %arg7: memref<3x1x128xf32, #tpu.memory_space<vmem>>, %arg8: memref<3x128x128xf32, #tpu.memory_space<vmem>>, %arg9: memref<3x128x128xf32, #tpu.memory_space<vmem>>, %arg10: memref<3x1x128xf32, #tpu.memory_space<vmem>>, %arg11: memref<128x128xf32, #tpu.memory_space<vmem>>, %arg12: memref<1x128xf32, #tpu.memory_space<vmem>>, %arg13: memref<128x128xf32, #tpu.memory_space<vmem>>, %arg14: memref<1x128xf32, #tpu.memory_space<vmem>>, %arg15: memref<2x128xf32, #tpu.memory_space<vmem>>) attributes {dimension_semantics = [], scalar_prefetch = 0 : i64, scratch_operands = 0 : i64, tpu.core_type = #tpu.core_type<tc>} {
    %0 = tpu.iota {dimensions = array<i32: 1>} : vector<32x16xi32>
    %c0 = arith.constant 0 : index
    %c0_0 = arith.constant 0 : index
    %1 = vector.load %arg0[%c0, %c0_0] : memref<32x1xi32, #tpu.memory_space<vmem>>, vector<32x1xi32>
    %2 = vector.broadcast %1 : vector<32x1xi32> to vector<32x16xi32>
    %3 = arith.cmpi eq, %0, %2 : vector<32x16xi32>
    %4 = arith.extui %3 : vector<32x16xi1> to vector<32x16xi32>
    %5 = arith.sitofp %4 : vector<32x16xi32> to vector<32x16xf32>
    %6 = tpu.iota {dimensions = array<i32: 0>} : vector<16x32xi32>
    %c0_1 = arith.constant 0 : index
    %c0_2 = arith.constant 0 : index
    %7 = vector.load %arg1[%c0_1, %c0_2] : memref<1x32xi32, #tpu.memory_space<vmem>>, vector<1x32xi32>
    %8 = vector.broadcast %7 : vector<1x32xi32> to vector<16x32xi32>
    %9 = arith.cmpi eq, %6, %8 : vector<16x32xi32>
    %10 = arith.extui %9 : vector<16x32xi1> to vector<16x32xi32>
    %11 = arith.sitofp %10 : vector<16x32xi32> to vector<16x32xf32>
    %12 = tpu.iota {dimensions = array<i32: 0>} : vector<2x16xi32>
    %c0_3 = arith.constant 0 : index
    %c0_4 = arith.constant 0 : index
    %13 = vector.load %arg2[%c0_3, %c0_4] : memref<1x16xi32, #tpu.memory_space<vmem>>, vector<1x16xi32>
    %14 = vector.broadcast %13 : vector<1x16xi32> to vector<2x16xi32>
    %15 = arith.cmpi eq, %12, %14 : vector<2x16xi32>
    %16 = arith.extui %15 : vector<2x16xi1> to vector<2x16xi32>
    %17 = arith.sitofp %16 : vector<2x16xi32> to vector<2x16xf32>
    %cst = arith.constant dense<0.000000e+00> : vector<2xf32>
    %18 = vector.multi_reduction <add>, %17, %cst [1] : vector<2x16xf32> to vector<2xf32>
    %19 = vector.shape_cast %18 : vector<2xf32> to vector<2x1xf32>
    %cst_5 = arith.constant 1.000000e+00 : f32
    %20 = vector.broadcast %cst_5 : f32 to vector<2x1xf32>
    %21 = arith.maximumf %19, %20 : vector<2x1xf32>
    %cst_6 = arith.constant 1.000000e+00 : f32
    %22 = vector.broadcast %cst_6 : f32 to vector<2x1xf32>
    %23 = arith.divf %22, %21 : vector<2x1xf32>
    %c0_7 = arith.constant 0 : index
    %c0_8 = arith.constant 0 : index
    %24 = vector.load %arg4[%c0_7, %c0_8] : memref<32x128xf32, #tpu.memory_space<vmem>>, vector<32x128xf32>
    %c0_9 = arith.constant 0 : index
    %c0_10 = arith.constant 0 : index
    %25 = vector.load %arg3[%c0_9, %c0_10] : memref<16x128xf32, #tpu.memory_space<vmem>>, vector<16x128xf32>
    %c0_11 = arith.constant 0 : index
    %c0_12 = arith.constant 0 : index
    %c0_13 = arith.constant 0 : index
    %26 = vector.load %arg5[%c0_11, %c0_12, %c0_13] : memref<3x128x128xf32, #tpu.memory_space<vmem>>, vector<1x128x128xf32>
    %27 = vector.shape_cast %26 : vector<1x128x128xf32> to vector<128x128xf32>
    %cst_14 = arith.constant dense<0.000000e+00> : vector<16x128xf32>
    %28 = tpu.matmul %25, %27, %cst_14 {dimension_numbers = #tpu.dot_dimension_numbers<[1], [0], [0], [1], [0, 0, 1, 1], [], []>} : vector<16x128xf32>, vector<128x128xf32>, vector<16x128xf32> -> vector<16x128xf32>
    %c0_15 = arith.constant 0 : index
    %c0_16 = arith.constant 0 : index
    %c0_17 = arith.constant 0 : index
    %29 = vector.load %arg6[%c0_15, %c0_16, %c0_17] : memref<3x128x128xf32, #tpu.memory_space<vmem>>, vector<1x128x128xf32>
    %30 = vector.shape_cast %29 : vector<1x128x128xf32> to vector<128x128xf32>
    %cst_18 = arith.constant dense<0.000000e+00> : vector<32x128xf32>
    %31 = tpu.matmul %24, %30, %cst_18 {dimension_numbers = #tpu.dot_dimension_numbers<[1], [0], [0], [1], [0, 0, 1, 1], [], []>} : vector<32x128xf32>, vector<128x128xf32>, vector<32x128xf32> -> vector<32x128xf32>
    %cst_19 = arith.constant dense<0.000000e+00> : vector<32x128xf32>
    %32 = tpu.matmul %5, %28, %cst_19 {dimension_numbers = #tpu.dot_dimension_numbers<[1], [0], [0], [1], [0, 0, 1, 1], [], []>} : vector<32x16xf32>, vector<16x128xf32>, vector<32x128xf32> -> vector<32x128xf32>
    %33 = arith.addf %32, %31 : vector<32x128xf32>
    %c0_20 = arith.constant 0 : index
    %c0_21 = arith.constant 0 : index
    %c0_22 = arith.constant 0 : index
    %34 = vector.load %arg7[%c0_20, %c0_21, %c0_22] : memref<3x1x128xf32, #tpu.memory_space<vmem>>, vector<1x1x128xf32>
    %35 = vector.shape_cast %34 : vector<1x1x128xf32> to vector<1x128xf32>
    %36 = vector.broadcast %35 : vector<1x128xf32> to vector<32x128xf32>
    %37 = arith.addf %33, %36 : vector<32x128xf32>
    %cst_23 = arith.constant 0.000000e+00 : f32
    %38 = vector.broadcast %cst_23 : f32 to vector<32x128xf32>
    %39 = arith.maximumf %37, %38 : vector<32x128xf32>
    %cst_24 = arith.constant dense<0.000000e+00> : vector<16x128xf32>
    %40 = tpu.matmul %11, %39, %cst_24 {dimension_numbers = #tpu.dot_dimension_numbers<[1], [0], [0], [1], [0, 0, 1, 1], [], []>} : vector<16x32xf32>, vector<32x128xf32>, vector<16x128xf32> -> vector<16x128xf32>
    %c0_25 = arith.constant 0 : index
    %c0_26 = arith.constant 0 : index
    %c0_27 = arith.constant 0 : index
    %41 = vector.load %arg8[%c0_25, %c0_26, %c0_27] : memref<3x128x128xf32, #tpu.memory_space<vmem>>, vector<1x128x128xf32>
    %42 = vector.shape_cast %41 : vector<1x128x128xf32> to vector<128x128xf32>
    %cst_28 = arith.constant dense<0.000000e+00> : vector<16x128xf32>
    %43 = tpu.matmul %25, %42, %cst_28 {dimension_numbers = #tpu.dot_dimension_numbers<[1], [0], [0], [1], [0, 0, 1, 1], [], []>} : vector<16x128xf32>, vector<128x128xf32>, vector<16x128xf32> -> vector<16x128xf32>
    %c0_29 = arith.constant 0 : index
    %c0_30 = arith.constant 0 : index
    %c0_31 = arith.constant 0 : index
    %44 = vector.load %arg9[%c0_29, %c0_30, %c0_31] : memref<3x128x128xf32, #tpu.memory_space<vmem>>, vector<1x128x128xf32>
    %45 = vector.shape_cast %44 : vector<1x128x128xf32> to vector<128x128xf32>
    %cst_32 = arith.constant dense<0.000000e+00> : vector<16x128xf32>
    %46 = tpu.matmul %40, %45, %cst_32 {dimension_numbers = #tpu.dot_dimension_numbers<[1], [0], [0], [1], [0, 0, 1, 1], [], []>} : vector<16x128xf32>, vector<128x128xf32>, vector<16x128xf32> -> vector<16x128xf32>
    %47 = arith.addf %43, %46 : vector<16x128xf32>
    %c0_33 = arith.constant 0 : index
    %c0_34 = arith.constant 0 : index
    %c0_35 = arith.constant 0 : index
    %48 = vector.load %arg10[%c0_33, %c0_34, %c0_35] : memref<3x1x128xf32, #tpu.memory_space<vmem>>, vector<1x1x128xf32>
    %49 = vector.shape_cast %48 : vector<1x1x128xf32> to vector<1x128xf32>
    %50 = vector.broadcast %49 : vector<1x128xf32> to vector<16x128xf32>
    %51 = arith.addf %47, %50 : vector<16x128xf32>
    %cst_36 = arith.constant 0.000000e+00 : f32
    %52 = vector.broadcast %cst_36 : f32 to vector<16x128xf32>
    %53 = arith.maximumf %51, %52 : vector<16x128xf32>
    %c1 = arith.constant 1 : index
    %c0_37 = arith.constant 0 : index
    %c0_38 = arith.constant 0 : index
    %54 = vector.load %arg5[%c1, %c0_37, %c0_38] : memref<3x128x128xf32, #tpu.memory_space<vmem>>, vector<1x128x128xf32>
    %55 = vector.shape_cast %54 : vector<1x128x128xf32> to vector<128x128xf32>
    %cst_39 = arith.constant dense<0.000000e+00> : vector<16x128xf32>
    %56 = tpu.matmul %53, %55, %cst_39 {dimension_numbers = #tpu.dot_dimension_numbers<[1], [0], [0], [1], [0, 0, 1, 1], [], []>} : vector<16x128xf32>, vector<128x128xf32>, vector<16x128xf32> -> vector<16x128xf32>
    %c1_40 = arith.constant 1 : index
    %c0_41 = arith.constant 0 : index
    %c0_42 = arith.constant 0 : index
    %57 = vector.load %arg6[%c1_40, %c0_41, %c0_42] : memref<3x128x128xf32, #tpu.memory_space<vmem>>, vector<1x128x128xf32>
    %58 = vector.shape_cast %57 : vector<1x128x128xf32> to vector<128x128xf32>
    %cst_43 = arith.constant dense<0.000000e+00> : vector<32x128xf32>
    %59 = tpu.matmul %24, %58, %cst_43 {dimension_numbers = #tpu.dot_dimension_numbers<[1], [0], [0], [1], [0, 0, 1, 1], [], []>} : vector<32x128xf32>, vector<128x128xf32>, vector<32x128xf32> -> vector<32x128xf32>
    %cst_44 = arith.constant dense<0.000000e+00> : vector<32x128xf32>
    %60 = tpu.matmul %5, %56, %cst_44 {dimension_numbers = #tpu.dot_dimension_numbers<[1], [0], [0], [1], [0, 0, 1, 1], [], []>} : vector<32x16xf32>, vector<16x128xf32>, vector<32x128xf32> -> vector<32x128xf32>
    %61 = arith.addf %60, %59 : vector<32x128xf32>
    %c1_45 = arith.constant 1 : index
    %c0_46 = arith.constant 0 : index
    %c0_47 = arith.constant 0 : index
    %62 = vector.load %arg7[%c1_45, %c0_46, %c0_47] : memref<3x1x128xf32, #tpu.memory_space<vmem>>, vector<1x1x128xf32>
    %63 = vector.shape_cast %62 : vector<1x1x128xf32> to vector<1x128xf32>
    %64 = vector.broadcast %63 : vector<1x128xf32> to vector<32x128xf32>
    %65 = arith.addf %61, %64 : vector<32x128xf32>
    %cst_48 = arith.constant 0.000000e+00 : f32
    %66 = vector.broadcast %cst_48 : f32 to vector<32x128xf32>
    %67 = arith.maximumf %65, %66 : vector<32x128xf32>
    %cst_49 = arith.constant dense<0.000000e+00> : vector<16x128xf32>
    %68 = tpu.matmul %11, %67, %cst_49 {dimension_numbers = #tpu.dot_dimension_numbers<[1], [0], [0], [1], [0, 0, 1, 1], [], []>} : vector<16x32xf32>, vector<32x128xf32>, vector<16x128xf32> -> vector<16x128xf32>
    %c1_50 = arith.constant 1 : index
    %c0_51 = arith.constant 0 : index
    %c0_52 = arith.constant 0 : index
    %69 = vector.load %arg8[%c1_50, %c0_51, %c0_52] : memref<3x128x128xf32, #tpu.memory_space<vmem>>, vector<1x128x128xf32>
    %70 = vector.shape_cast %69 : vector<1x128x128xf32> to vector<128x128xf32>
    %cst_53 = arith.constant dense<0.000000e+00> : vector<16x128xf32>
    %71 = tpu.matmul %53, %70, %cst_53 {dimension_numbers = #tpu.dot_dimension_numbers<[1], [0], [0], [1], [0, 0, 1, 1], [], []>} : vector<16x128xf32>, vector<128x128xf32>, vector<16x128xf32> -> vector<16x128xf32>
    %c1_54 = arith.constant 1 : index
    %c0_55 = arith.constant 0 : index
    %c0_56 = arith.constant 0 : index
    %72 = vector.load %arg9[%c1_54, %c0_55, %c0_56] : memref<3x128x128xf32, #tpu.memory_space<vmem>>, vector<1x128x128xf32>
    %73 = vector.shape_cast %72 : vector<1x128x128xf32> to vector<128x128xf32>
    %cst_57 = arith.constant dense<0.000000e+00> : vector<16x128xf32>
    %74 = tpu.matmul %68, %73, %cst_57 {dimension_numbers = #tpu.dot_dimension_numbers<[1], [0], [0], [1], [0, 0, 1, 1], [], []>} : vector<16x128xf32>, vector<128x128xf32>, vector<16x128xf32> -> vector<16x128xf32>
    %75 = arith.addf %71, %74 : vector<16x128xf32>
    %c1_58 = arith.constant 1 : index
    %c0_59 = arith.constant 0 : index
    %c0_60 = arith.constant 0 : index
    %76 = vector.load %arg10[%c1_58, %c0_59, %c0_60] : memref<3x1x128xf32, #tpu.memory_space<vmem>>, vector<1x1x128xf32>
    %77 = vector.shape_cast %76 : vector<1x1x128xf32> to vector<1x128xf32>
    %78 = vector.broadcast %77 : vector<1x128xf32> to vector<16x128xf32>
    %79 = arith.addf %75, %78 : vector<16x128xf32>
    %cst_61 = arith.constant 0.000000e+00 : f32
    %80 = vector.broadcast %cst_61 : f32 to vector<16x128xf32>
    %81 = arith.maximumf %79, %80 : vector<16x128xf32>
    %c2 = arith.constant 2 : index
    %c0_62 = arith.constant 0 : index
    %c0_63 = arith.constant 0 : index
    %82 = vector.load %arg5[%c2, %c0_62, %c0_63] : memref<3x128x128xf32, #tpu.memory_space<vmem>>, vector<1x128x128xf32>
    %83 = vector.shape_cast %82 : vector<1x128x128xf32> to vector<128x128xf32>
    %cst_64 = arith.constant dense<0.000000e+00> : vector<16x128xf32>
    %84 = tpu.matmul %81, %83, %cst_64 {dimension_numbers = #tpu.dot_dimension_numbers<[1], [0], [0], [1], [0, 0, 1, 1], [], []>} : vector<16x128xf32>, vector<128x128xf32>, vector<16x128xf32> -> vector<16x128xf32>
    %c2_65 = arith.constant 2 : index
    %c0_66 = arith.constant 0 : index
    %c0_67 = arith.constant 0 : index
    %85 = vector.load %arg6[%c2_65, %c0_66, %c0_67] : memref<3x128x128xf32, #tpu.memory_space<vmem>>, vector<1x128x128xf32>
    %86 = vector.shape_cast %85 : vector<1x128x128xf32> to vector<128x128xf32>
    %cst_68 = arith.constant dense<0.000000e+00> : vector<32x128xf32>
    %87 = tpu.matmul %24, %86, %cst_68 {dimension_numbers = #tpu.dot_dimension_numbers<[1], [0], [0], [1], [0, 0, 1, 1], [], []>} : vector<32x128xf32>, vector<128x128xf32>, vector<32x128xf32> -> vector<32x128xf32>
    %cst_69 = arith.constant dense<0.000000e+00> : vector<32x128xf32>
    %88 = tpu.matmul %5, %84, %cst_69 {dimension_numbers = #tpu.dot_dimension_numbers<[1], [0], [0], [1], [0, 0, 1, 1], [], []>} : vector<32x16xf32>, vector<16x128xf32>, vector<32x128xf32> -> vector<32x128xf32>
    %89 = arith.addf %88, %87 : vector<32x128xf32>
    %c2_70 = arith.constant 2 : index
    %c0_71 = arith.constant 0 : index
    %c0_72 = arith.constant 0 : index
    %90 = vector.load %arg7[%c2_70, %c0_71, %c0_72] : memref<3x1x128xf32, #tpu.memory_space<vmem>>, vector<1x1x128xf32>
    %91 = vector.shape_cast %90 : vector<1x1x128xf32> to vector<1x128xf32>
    %92 = vector.broadcast %91 : vector<1x128xf32> to vector<32x128xf32>
    %93 = arith.addf %89, %92 : vector<32x128xf32>
    %cst_73 = arith.constant 0.000000e+00 : f32
    %94 = vector.broadcast %cst_73 : f32 to vector<32x128xf32>
    %95 = arith.maximumf %93, %94 : vector<32x128xf32>
    %cst_74 = arith.constant dense<0.000000e+00> : vector<16x128xf32>
    %96 = tpu.matmul %11, %95, %cst_74 {dimension_numbers = #tpu.dot_dimension_numbers<[1], [0], [0], [1], [0, 0, 1, 1], [], []>} : vector<16x32xf32>, vector<32x128xf32>, vector<16x128xf32> -> vector<16x128xf32>
    %c2_75 = arith.constant 2 : index
    %c0_76 = arith.constant 0 : index
    %c0_77 = arith.constant 0 : index
    %97 = vector.load %arg8[%c2_75, %c0_76, %c0_77] : memref<3x128x128xf32, #tpu.memory_space<vmem>>, vector<1x128x128xf32>
    %98 = vector.shape_cast %97 : vector<1x128x128xf32> to vector<128x128xf32>
    %cst_78 = arith.constant dense<0.000000e+00> : vector<16x128xf32>
    %99 = tpu.matmul %81, %98, %cst_78 {dimension_numbers = #tpu.dot_dimension_numbers<[1], [0], [0], [1], [0, 0, 1, 1], [], []>} : vector<16x128xf32>, vector<128x128xf32>, vector<16x128xf32> -> vector<16x128xf32>
    %c2_79 = arith.constant 2 : index
    %c0_80 = arith.constant 0 : index
    %c0_81 = arith.constant 0 : index
    %100 = vector.load %arg9[%c2_79, %c0_80, %c0_81] : memref<3x128x128xf32, #tpu.memory_space<vmem>>, vector<1x128x128xf32>
    %101 = vector.shape_cast %100 : vector<1x128x128xf32> to vector<128x128xf32>
    %cst_82 = arith.constant dense<0.000000e+00> : vector<16x128xf32>
    %102 = tpu.matmul %96, %101, %cst_82 {dimension_numbers = #tpu.dot_dimension_numbers<[1], [0], [0], [1], [0, 0, 1, 1], [], []>} : vector<16x128xf32>, vector<128x128xf32>, vector<16x128xf32> -> vector<16x128xf32>
    %103 = arith.addf %99, %102 : vector<16x128xf32>
    %c2_83 = arith.constant 2 : index
    %c0_84 = arith.constant 0 : index
    %c0_85 = arith.constant 0 : index
    %104 = vector.load %arg10[%c2_83, %c0_84, %c0_85] : memref<3x1x128xf32, #tpu.memory_space<vmem>>, vector<1x1x128xf32>
    %105 = vector.shape_cast %104 : vector<1x1x128xf32> to vector<1x128xf32>
    %106 = vector.broadcast %105 : vector<1x128xf32> to vector<16x128xf32>
    %107 = arith.addf %103, %106 : vector<16x128xf32>
    %cst_86 = arith.constant 0.000000e+00 : f32
    %108 = vector.broadcast %cst_86 : f32 to vector<16x128xf32>
    %109 = arith.maximumf %107, %108 : vector<16x128xf32>
    %cst_87 = arith.constant dense<0.000000e+00> : vector<2x128xf32>
    %110 = tpu.matmul %17, %109, %cst_87 {dimension_numbers = #tpu.dot_dimension_numbers<[1], [0], [0], [1], [0, 0, 1, 1], [], []>} : vector<2x16xf32>, vector<16x128xf32>, vector<2x128xf32> -> vector<2x128xf32>
    %111 = vector.broadcast %23 : vector<2x1xf32> to vector<2x128xf32>
    %112 = arith.mulf %110, %111 : vector<2x128xf32>
    %c0_88 = arith.constant 0 : index
    %c0_89 = arith.constant 0 : index
    %113 = vector.load %arg11[%c0_88, %c0_89] : memref<128x128xf32, #tpu.memory_space<vmem>>, vector<128x128xf32>
    %cst_90 = arith.constant dense<0.000000e+00> : vector<2x128xf32>
    %114 = tpu.matmul %112, %113, %cst_90 {dimension_numbers = #tpu.dot_dimension_numbers<[1], [0], [0], [1], [0, 0, 1, 1], [], []>} : vector<2x128xf32>, vector<128x128xf32>, vector<2x128xf32> -> vector<2x128xf32>
    %c0_91 = arith.constant 0 : index
    %c0_92 = arith.constant 0 : index
    %115 = vector.load %arg12[%c0_91, %c0_92] : memref<1x128xf32, #tpu.memory_space<vmem>>, vector<1x128xf32>
    %116 = vector.broadcast %115 : vector<1x128xf32> to vector<2x128xf32>
    %117 = arith.addf %114, %116 : vector<2x128xf32>
    %cst_93 = arith.constant 0.000000e+00 : f32
    %118 = vector.broadcast %cst_93 : f32 to vector<2x128xf32>
    %119 = arith.maximumf %117, %118 : vector<2x128xf32>
    %c0_94 = arith.constant 0 : index
    %c0_95 = arith.constant 0 : index
    %120 = vector.load %arg13[%c0_94, %c0_95] : memref<128x128xf32, #tpu.memory_space<vmem>>, vector<128x128xf32>
    %cst_96 = arith.constant dense<0.000000e+00> : vector<2x128xf32>
    %121 = tpu.matmul %119, %120, %cst_96 {dimension_numbers = #tpu.dot_dimension_numbers<[1], [0], [0], [1], [0, 0, 1, 1], [], []>} : vector<2x128xf32>, vector<128x128xf32>, vector<2x128xf32> -> vector<2x128xf32>
    %c0_97 = arith.constant 0 : index
    %c0_98 = arith.constant 0 : index
    %122 = vector.load %arg14[%c0_97, %c0_98] : memref<1x128xf32, #tpu.memory_space<vmem>>, vector<1x128xf32>
    %123 = vector.broadcast %122 : vector<1x128xf32> to vector<2x128xf32>
    %124 = arith.addf %121, %123 : vector<2x128xf32>
    %c0_99 = arith.constant 0 : index
    %c0_100 = arith.constant 0 : index
    %125 = vector.load %arg15[%c0_99, %c0_100] : memref<2x128xf32, #tpu.memory_space<vmem>>, vector<2x128xf32>
    tpu.vector_store %arg15[%c0_99, %c0_100], %124 {strides = array<i32>} : memref<2x128xf32, #tpu.memory_space<vmem>>, vector<2x128xf32>,
    return
  }
}

</mosaic_0001>

<llo_original>
// kernel: _lambda_.1
$region0: #{_lambda_.1}
  #allocation0 [shape = 'u32[]', space=smem, size = 0x4, offset = 0x4, fixed_abs, tag = 'smem constant byte address 0x4 - core index']
  #allocation1 [shape = 'u32[144,128]{1,0:T(1,128)}', space=vmem, size = 0x12000, scoped, tag = 'internal scratch']
  %s0 = inlined_call_operand.vmem [shape: s32[32,1], index: 0, kind: input, shape index: {}]
  %s1 = inlined_call_operand.vmem [shape: s32[1,32], index: 1, kind: input, shape index: {}]
  %s2 = inlined_call_operand.vmem [shape: s32[1,16], index: 2, kind: input, shape index: {}]
  %s3 = inlined_call_operand.vmem [shape: f32[16,128], index: 3, kind: input, shape index: {}]
  %s4 = inlined_call_operand.vmem [shape: f32[32,128], index: 4, kind: input, shape index: {}]
  %s5 = inlined_call_operand.hbm [shape: f32[3,128,128], index: 5, kind: input, shape index: {}]
  %s6 = inlined_call_operand.hbm [shape: f32[3,128,128], index: 6, kind: input, shape index: {}]
  %s7 = inlined_call_operand.vmem [shape: f32[3,1,128], index: 7, kind: input, shape index: {}]
  %s8 = inlined_call_operand.hbm [shape: f32[3,128,128], index: 8, kind: input, shape index: {}]
  %s9 = inlined_call_operand.hbm [shape: f32[3,128,128], index: 9, kind: input, shape index: {}]
  %s10 = inlined_call_operand.vmem [shape: f32[3,1,128], index: 10, kind: input, shape index: {}]
  %s11 = inlined_call_operand.vmem [shape: f32[128,128], index: 11, kind: input, shape index: {}]
  %s12 = inlined_call_operand.vmem [shape: f32[1,128], index: 12, kind: input, shape index: {}]
  %s13 = inlined_call_operand.vmem [shape: f32[128,128], index: 13, kind: input, shape index: {}]
  %s14 = inlined_call_operand.vmem [shape: f32[1,128], index: 14, kind: input, shape index: {}]
  %s15 = inlined_call_operand.vmem [shape: f32[2,128], index: 15, kind: output, shape index: {}]
  %s16 = sld [smem:[#allocation0]]
  $region86: #{_lambda_.1} parent=0
    _
  %s18 = ssub.s32 1, %s16
  %s19 = scalar_select 0, %s18, %s16
  $region1: #{_lambda_.1} parent=0
    #allocation2 [shape = 'u8[196608]{0}', space=vmem, size = 0x30000, scoped, tag = 'input window, operand 5, single buffered']
    #allocation3 [shape = 's32[1]{0}', space=sflag, size = 0x4, scoped, tag = 'scoped memory for _lambda_.1']
    #allocation4 [shape = 'u8[196608]{0}', space=vmem, size = 0x30000, scoped, tag = 'input window, operand 6, single buffered']
    #allocation5 [shape = 's32[1]{0}', space=sflag, size = 0x4, scoped, tag = 'scoped memory for _lambda_.1']
    #allocation6 [shape = 'u8[196608]{0}', space=vmem, size = 0x30000, scoped, tag = 'input window, operand 8, single buffered']
    #allocation7 [shape = 'u8[196608]{0}', space=vmem, size = 0x30000, scoped, tag = 'input window, operand 9, single buffered']
    #allocation8 [shape = 's32[1]{0}', space=sflag, size = 0x4, scoped, tag = 'scoped memory for _lambda_.1']
    %20 = vsyncpa [#allocation3], 0
    %21 = vsyncpa [#allocation5], 0
    %22 = vsyncpa [#allocation8], 0
    // Predicated region
    $region2: #{_lambda_.1} parent=1 // pred_check
      _
    $region3: #{_lambda_.1} parent=1 // pred_check_branch
      %24 = sbr.rel (0) target = $region5
    $region4: #{_lambda_.1} parent=1 // pred_region
      _
    $region5: #{_lambda_.1} parent=1 // pred_fallthru
      _
    // Predicated region
    $region6: #{_lambda_.1} parent=1 // pred_check
      _
    $region7: #{_lambda_.1} parent=1 // pred_check_branch
      %26 = sbr.rel (0) target = $region9
    $region8: #{_lambda_.1} parent=1 // pred_region
      _
    $region9: #{_lambda_.1} parent=1 // pred_fallthru
      _
    // Predicated region
    $region10: #{_lambda_.1} parent=1 // pred_check
      _
    $region11: #{_lambda_.1} parent=1 // pred_check_branch
      %28 = sbr.rel (0) target = $region13
    $region12: #{_lambda_.1} parent=1 // pred_region
      _
    $region13: #{_lambda_.1} parent=1 // pred_fallthru
      _
    // Predicated region
    $region14: #{_lambda_.1} parent=1 // pred_check
      _
    $region15: #{_lambda_.1} parent=1 // pred_check_branch
      %30 = sbr.rel (0) target = $region17
    $region16: #{_lambda_.1} parent=1 // pred_region
      _
    $region17: #{_lambda_.1} parent=1 // pred_fallthru
      _
    // Predicated region
    $region18: #{_lambda_.1} parent=1 // pred_check
      _
    $region19: #{_lambda_.1} parent=1 // pred_check_branch
      %32 = sbr.rel (0) target = $region21
    $region20: #{_lambda_.1} parent=1 // pred_region
      _
    $region21: #{_lambda_.1} parent=1 // pred_fallthru
      _
    // Predicated region
    $region22: #{_lambda_.1} parent=1 // pred_check
      _
    $region23: #{_lambda_.1} parent=1 // pred_check_branch
      %34 = sbr.rel (0) target = $region25
    $region24: #{_lambda_.1} parent=1 // pred_region
      %s36 = ssub.s32 6144, 6144
      %37 = vsyncadd [#allocation3], %s36
      %s38 = sshll.u32 [#allocation2], 4
      %s39 = int_to_ptr.vmem [resolvable:$true] %s38
      %44 = dma.hbm_to_vmem [thread:$0]  %s5, 6144, %s39, [#allocation3], 128, 128, 8
    $region25: #{_lambda_.1} parent=1 // pred_fallthru
      _
    // Predicated region
    $region26: #{_lambda_.1} parent=1 // pred_check
      _
    $region27: #{_lambda_.1} parent=1 // pred_check_branch
      %46 = sbr.rel (0) target = $region29
    $region28: #{_lambda_.1} parent=1 // pred_region
      %s48 = ssub.s32 6144, 6144
      %49 = vsyncadd [#allocation5], %s48
      %s50 = sshll.u32 [#allocation4], 4
      %s51 = int_to_ptr.vmem [resolvable:$true] %s50
      %56 = dma.hbm_to_vmem [thread:$0]  %s6, 6144, %s51, [#allocation5], 128, 128, 8
    $region29: #{_lambda_.1} parent=1 // pred_fallthru
      _
    // Predicated region
    $region30: #{_lambda_.1} parent=1 // pred_check
      _
    $region31: #{_lambda_.1} parent=1 // pred_check_branch
      %58 = sbr.rel (0) target = $region33
    $region32: #{_lambda_.1} parent=1 // pred_region
      _
    $region33: #{_lambda_.1} parent=1 // pred_fallthru
      _
    // Predicated region
    $region34: #{_lambda_.1} parent=1 // pred_check
      _
    $region35: #{_lambda_.1} parent=1 // pred_check_branch
      %60 = sbr.rel (0) target = $region37
    $region36: #{_lambda_.1} parent=1 // pred_region
      %s62 = ssub.s32 6144, 6144
      %63 = vsyncadd [#allocation5], %s62
      %s64 = sshll.u32 [#allocation6], 4
      %s65 = int_to_ptr.vmem [resolvable:$true] %s64
      %70 = dma.hbm_to_vmem [thread:$0]  %s8, 6144, %s65, [#allocation5], 128, 128, 8
    $region37: #{_lambda_.1} parent=1 // pred_fallthru
      _
    // Predicated region
    $region38: #{_lambda_.1} parent=1 // pred_check
      _
    $region39: #{_lambda_.1} parent=1 // pred_check_branch
      %72 = sbr.rel (0) target = $region41
    $region40: #{_lambda_.1} parent=1 // pred_region
      %s74 = ssub.s32 6144, 6144
      %75 = vsyncadd [#allocation8], %s74
      %s76 = sshll.u32 [#allocation7], 4
      %s77 = int_to_ptr.vmem [resolvable:$true] %s76
      %82 = dma.hbm_to_vmem [thread:$0]  %s9, 6144, %s77, [#allocation8], 128, 128, 8
    $region41: #{_lambda_.1} parent=1 // pred_fallthru
      _
    // Predicated region
    $region42: #{_lambda_.1} parent=1 // pred_check
      _
    $region43: #{_lambda_.1} parent=1 // pred_check_branch
      %84 = sbr.rel (0) target = $region45
    $region44: #{_lambda_.1} parent=1 // pred_region
      _
    $region45: #{_lambda_.1} parent=1 // pred_fallthru
      _
    // Predicated region
    $region46: #{_lambda_.1} parent=1 // pred_check
      _
    $region47: #{_lambda_.1} parent=1 // pred_check_branch
      %86 = sbr.rel (0) target = $region49
    $region48: #{_lambda_.1} parent=1 // pred_region
      _
    $region49: #{_lambda_.1} parent=1 // pred_fallthru
      _
    // Predicated region
    $region50: #{_lambda_.1} parent=1 // pred_check
      _
    $region51: #{_lambda_.1} parent=1 // pred_check_branch
      %88 = sbr.rel (0) target = $region53
    $region52: #{_lambda_.1} parent=1 // pred_region
      _
    $region53: #{_lambda_.1} parent=1 // pred_fallthru
      _
    // Predicated region
    $region54: #{_lambda_.1} parent=1 // pred_check
      _
    $region55: #{_lambda_.1} parent=1 // pred_check_branch
      %90 = sbr.rel (0) target = $region57
    $region56: #{_lambda_.1} parent=1 // pred_region
      _
    $region57: #{_lambda_.1} parent=1 // pred_fallthru
      _
    // Predicated region
    $region58: #{_lambda_.1} parent=1 // pred_check
      _
    $region59: #{_lambda_.1} parent=1 // pred_check_branch
      %92 = sbr.rel (0) target = $region61
    $region60: #{_lambda_.1} parent=1 // pred_region
      _
    $region61: #{_lambda_.1} parent=1 // pred_fallthru
      _
    // Predicated region
    $region62: #{_lambda_.1} parent=1 // pred_check
      _
    $region63: #{_lambda_.1} parent=1 // pred_check_branch
      %94 = sbr.rel (0) target = $region65
    $region64: #{_lambda_.1} parent=1 // pred_region
      %95 = dma.done [#allocation3], 6144
    $region65: #{_lambda_.1} parent=1 // pred_fallthru
      _
    // Predicated region
    $region66: #{_lambda_.1} parent=1 // pred_check
      _
    $region67: #{_lambda_.1} parent=1 // pred_check_branch
      %97 = sbr.rel (0) target = $region69
    $region68: #{_lambda_.1} parent=1 // pred_region
      %98 = dma.done [#allocation5], 6144
    $region69: #{_lambda_.1} parent=1 // pred_fallthru
      _
    // Predicated region
    $region70: #{_lambda_.1} parent=1 // pred_check
      _
    $region71: #{_lambda_.1} parent=1 // pred_check_branch
      %100 = sbr.rel (0) target = $region73
    $region72: #{_lambda_.1} parent=1 // pred_region
      %101 = dma.done [#allocation5], 6144
    $region73: #{_lambda_.1} parent=1 // pred_fallthru
      _
    // Predicated region
    $region74: #{_lambda_.1} parent=1 // pred_check
      _
    $region75: #{_lambda_.1} parent=1 // pred_check_branch
      %103 = sbr.rel (0) target = $region77
    $region76: #{_lambda_.1} parent=1 // pred_region
      %104 = dma.done [#allocation8], 6144
    $region77: #{_lambda_.1} parent=1 // pred_fallthru
      _
    %v105 = vlaneseq
    %v106 = vand.u32 %v105, 127
    %v107 = vld [vmem:[%s0] sm:$0xff]
    %v108 = vld [vmem:[%s0 + $0x8] sm:$0xff]
    %v109 = vld [vmem:[%s0 + $0x10] sm:$0xff]
    %v110 = vld [vmem:[%s0 + $0x18] sm:$0xff]
    %111 = vset.pattern.permute.xlu0 0
    %112 = vperm.xlu0 %111, %v107
    %v113 = vpop.permute.xlu0 %112
    %114 = vset.pattern.permute.xlu0 0
    %115 = vperm.xlu0 %114, %v108
    %v116 = vpop.permute.xlu0 %115
    %117 = vset.pattern.permute.xlu0 0
    %118 = vperm.xlu0 %117, %v109
    %v119 = vpop.permute.xlu0 %118
    %120 = vset.pattern.permute.xlu0 0
    %121 = vperm.xlu0 %120, %v110
    %v122 = vpop.permute.xlu0 %121
    %vm123 = vcmp.eq.s32.totalorder %v106, %v113
    %vm124 = vcmp.eq.s32.totalorder %v106, %v116
    %vm125 = vcmp.eq.s32.totalorder %v106, %v119
    %vm126 = vcmp.eq.s32.totalorder %v106, %v122
    %v127 = vsel %vm123, 1, 0
    %v128 = vsel %vm124, 1, 0
    %v129 = vsel %vm125, 1, 0
    %v130 = vsel %vm126, 1, 0
    %v131 = vcvt.s32.f32 %v127
    %v132 = vcvt.s32.f32 %v128
    %v133 = vcvt.s32.f32 %v129
    %v134 = vcvt.s32.f32 %v130
    %v135 = vlaneseq
    %v136 = vshrl.u32 %v135, 7
    %v137 = vadd.s32 %v136, 8
    %v138 = vld [vmem:[%s1] sm:$0x1]
    %v139 = vlaneseq
    %v140 = vshrl.u32 %v139, 7
    %v141 = vsub.s32 0, %v140
    %v142 = vrot.slane %v138, %v141
    %vm143 = vcmp.eq.s32.totalorder %v136, %v142
    %vm144 = vcmp.eq.s32.totalorder %v137, %v142
    %v145 = vsel %vm143, 1, 0
    %v146 = vsel %vm144, 1, 0
    %v147 = vcvt.s32.f32 %v145
    %v148 = vcvt.s32.f32 %v146
    %v149 = vld [vmem:[%s2] sm:$0x1]
    %v150 = vlaneseq
    %v151 = vshrl.u32 %v150, 7
    %v152 = vsub.s32 0, %v151
    %v153 = vrot.slane %v149, %v152
    %vm154 = vcmp.eq.s32.totalorder %v136, %v153
    %v155 = vsel %vm154, 1, 0
    %v156 = vcvt.s32.f32 %v155
    %vm157 = vcmask 123904
    %v158 = vsel %vm157, %v156, 0.0
    %159 = vadd.xlane.f32.xlu0 %v158
    %v160 = vpop.xlane.xlu0 %159
    %v161 = vmax.f32 %v160, 1.0
    %v162 = vrcp.pop %v161
    %v163 = vmul.f32 1.0, %v162
    %v164 = vld [vmem:[%s4] sm:$0xff]
    %v165 = vld [vmem:[%s4 + $0x8] sm:$0xff]
    %v166 = vld [vmem:[%s4 + $0x10] sm:$0xff]
    %v167 = vld [vmem:[%s4 + $0x18] sm:$0xff]
    %v168 = vld [vmem:[%s3] sm:$0xff]
    %v169 = vld [vmem:[%s3 + $0x8] sm:$0xff]
    %v170 = vld [vmem:[#allocation2] sm:$0xff]
    %v171 = vld [vmem:[#allocation2 + $0x8] sm:$0xff]
    %v172 = vld [vmem:[#allocation2 + $0x10] sm:$0xff]
    %v173 = vld [vmem:[#allocation2 + $0x18] sm:$0xff]
    %v174 = vld [vmem:[#allocation2 + $0x20] sm:$0xff]
    %v175 = vld [vmem:[#allocation2 + $0x28] sm:$0xff]
    %v176 = vld [vmem:[#allocation2 + $0x30] sm:$0xff]
    %v177 = vld [vmem:[#allocation2 + $0x38] sm:$0xff]
    %v178 = vld [vmem:[#allocation2 + $0x40] sm:$0xff]
    %v179 = vld [vmem:[#allocation2 + $0x48] sm:$0xff]
    %v180 = vld [vmem:[#allocation2 + $0x50] sm:$0xff]
    %v181 = vld [vmem:[#allocation2 + $0x58] sm:$0xff]
    %v182 = vld [vmem:[#allocation2 + $0x60] sm:$0xff]
    %v183 = vld [vmem:[#allocation2 + $0x68] sm:$0xff]
    %v184 = vld [vmem:[#allocation2 + $0x70] sm:$0xff]
    %v185 = vld [vmem:[#allocation2 + $0x78] sm:$0xff]
    %186 = vmatprep.subr.mxu0 0.0
    %187 = vmatpush1.msra.mxu0 %v170
    %188 = vmatprep.subr.mxu0 0.0
    %189 = vmatpush1.msra.mxu0 %v171
    %190 = vmatprep.subr.mxu0 0.0
    %191 = vmatpush1.msra.mxu0 %v172
    %192 = vmatprep.subr.mxu0 0.0
    %193 = vmatpush1.msra.mxu0 %v173
    %194 = vmatprep.subr.mxu0 0.0
    %195 = vmatpush1.msra.mxu0 %v174
    %196 = vmatprep.subr.mxu0 0.0
    %197 = vmatpush1.msra.mxu0 %v175
    %198 = vmatprep.subr.mxu0 0.0
    %199 = vmatpush1.msra.mxu0 %v176
    %200 = vmatprep.subr.mxu0 0.0
    %201 = vmatpush1.msra.mxu0 %v177
    %202 = vmatprep.subr.mxu0 0.0
    %203 = vmatpush1.msra.mxu0 %v178
    %204 = vmatprep.subr.mxu0 0.0
    %205 = vmatpush1.msra.mxu0 %v179
    %206 = vmatprep.subr.mxu0 0.0
    %207 = vmatpush1.msra.mxu0 %v180
    %208 = vmatprep.subr.mxu0 0.0
    %209 = vmatpush1.msra.mxu0 %v181
    %210 = vmatprep.subr.mxu0 0.0
    %211 = vmatpush1.msra.mxu0 %v182
    %212 = vmatprep.subr.mxu0 0.0
    %213 = vmatpush1.msra.mxu0 %v183
    %214 = vmatprep.subr.mxu0 0.0
    %215 = vmatpush1.msra.mxu0 %v184
    %216 = vmatprep.subr.mxu0 0.0
    %217 = vmatpush1.msra.mxu0 %v185
    %218 = vmatprep.subr.mxu0 0.0
    %219 = vmatpush1.msra.mxu0 0.0
    %220 = vmatprep.subr.mxu0 0.0
    %221 = vmatpush1.msra.mxu0 0.0
    %222 = vmatprep.subr.mxu0 0.0
    %223 = vmatpush1.msra.mxu0 0.0
    %224 = vmatprep.subr.mxu0 0.0
    %225 = vmatpush1.msra.mxu0 0.0
    %226 = vmatprep.subr.mxu0 0.0
    %227 = vmatpush1.msra.mxu0 0.0
    %228 = vmatprep.subr.mxu0 0.0
    %229 = vmatpush1.msra.mxu0 0.0
    %230 = vmatprep.subr.mxu0 0.0
    %231 = vmatpush1.msra.mxu0 0.0
    %232 = vmatprep.subr.mxu0 0.0
    %233 = vmatpush1.msra.mxu0 0.0
    %234 = vmatprep.subr.mxu0 0.0
    %235 = vmatpush1.msra.mxu0 0.0
    %236 = vmatprep.subr.mxu0 0.0
    %237 = vmatpush1.msra.mxu0 0.0
    %238 = vmatprep.subr.mxu0 0.0
    %239 = vmatpush1.msra.mxu0 0.0
    %240 = vmatprep.subr.mxu0 0.0
    %241 = vmatpush1.msra.mxu0 0.0
    %242 = vmatprep.subr.mxu0 0.0
    %243 = vmatpush1.msra.mxu0 0.0
    %244 = vmatprep.subr.mxu0 0.0
    %245 = vmatpush1.msra.mxu0 0.0
    %246 = vmatprep.subr.mxu0 0.0
    %247 = vmatpush1.msra.mxu0 0.0
    %248 = vmatprep.subr.mxu0 0.0
    %249 = vmatpush1.msra.mxu0 0.0
    %250 = vmatprep.mubr.f32.mxu0 0.0
    %251 = vmatmul.mubr.f32.gmra.mrb[0].mxu0 %v168
    %v252 = vpop.f32.mrb[0].mxu0
    %v253 = vadd.f32 0.0, %v252
    %v254 = vpop.f32.mrb[0].mxu0
    %255 = vmatprep.mubr.f32.mxu0 0.0
    %256 = vmatmul.mubr.f32.gmra.mrb[0].mxu0 %v169
    %v257 = vpop.f32.mrb[0].mxu0
    %v258 = vadd.f32 0.0, %v257
    %v259 = vpop.f32.mrb[0].mxu0
    %260 = vdwg.mxu0
    %v261 = vld [vmem:[#allocation4] sm:$0xff]
    %v262 = vld [vmem:[#allocation4 + $0x8] sm:$0xff]
    %v263 = vld [vmem:[#allocation4 + $0x10] sm:$0xff]
    %v264 = vld [vmem:[#allocation4 + $0x18] sm:$0xff]
    %v265 = vld [vmem:[#allocation4 + $0x20] sm:$0xff]
    %v266 = vld [vmem:[#allocation4 + $0x28] sm:$0xff]
    %v267 = vld [vmem:[#allocation4 + $0x30] sm:$0xff]
    %v268 = vld [vmem:[#allocation4 + $0x38] sm:$0xff]
    %v269 = vld [vmem:[#allocation4 + $0x40] sm:$0xff]
    %v270 = vld [vmem:[#allocation4 + $0x48] sm:$0xff]
    %v271 = vld [vmem:[#allocation4 + $0x50] sm:$0xff]
    %v272 = vld [vmem:[#allocation4 + $0x58] sm:$0xff]
    %v273 = vld [vmem:[#allocation4 + $0x60] sm:$0xff]
    %v274 = vld [vmem:[#allocation4 + $0x68] sm:$0xff]
    %v275 = vld [vmem:[#allocation4 + $0x70] sm:$0xff]
    %v276 = vld [vmem:[#allocation4 + $0x78] sm:$0xff]
    %277 = vmatprep.subr.mxu0 0.0
    %278 = vmatpush1.msra.mxu0 %v261
    %279 = vmatprep.subr.mxu0 0.0
    %280 = vmatpush1.msra.mxu0 %v262
    %281 = vmatprep.subr.mxu0 0.0
    %282 = vmatpush1.msra.mxu0 %v263
    %283 = vmatprep.subr.mxu0 0.0
    %284 = vmatpush1.msra.mxu0 %v264
    %285 = vmatprep.subr.mxu0 0.0
    %286 = vmatpush1.msra.mxu0 %v265
    %287 = vmatprep.subr.mxu0 0.0
    %288 = vmatpush1.msra.mxu0 %v266
    %289 = vmatprep.subr.mxu0 0.0
    %290 = vmatpush1.msra.mxu0 %v267
    %291 = vmatprep.subr.mxu0 0.0
    %292 = vmatpush1.msra.mxu0 %v268
    %293 = vmatprep.subr.mxu0 0.0
    %294 = vmatpush1.msra.mxu0 %v269
    %295 = vmatprep.subr.mxu0 0.0
    %296 = vmatpush1.msra.mxu0 %v270
    %297 = vmatprep.subr.mxu0 0.0
    %298 = vmatpush1.msra.mxu0 %v271
    %299 = vmatprep.subr.mxu0 0.0
    %300 = vmatpush1.msra.mxu0 %v272
    %301 = vmatprep.subr.mxu0 0.0
    %302 = vmatpush1.msra.mxu0 %v273
    %303 = vmatprep.subr.mxu0 0.0
    %304 = vmatpush1.msra.mxu0 %v274
    %305 = vmatprep.subr.mxu0 0.0
    %306 = vmatpush1.msra.mxu0 %v275
    %307 = vmatprep.subr.mxu0 0.0
    %308 = vmatpush1.msra.mxu0 %v276
    %309 = vmatprep.subr.mxu0 0.0
    %310 = vmatpush1.msra.mxu0 0.0
    %311 = vmatprep.subr.mxu0 0.0
    %312 = vmatpush1.msra.mxu0 0.0
    %313 = vmatprep.subr.mxu0 0.0
    %314 = vmatpush1.msra.mxu0 0.0
    %315 = vmatprep.subr.mxu0 0.0
    %316 = vmatpush1.msra.mxu0 0.0
    %317 = vmatprep.subr.mxu0 0.0
    %318 = vmatpush1.msra.mxu0 0.0
    %319 = vmatprep.subr.mxu0 0.0
    %320 = vmatpush1.msra.mxu0 0.0
    %321 = vmatprep.subr.mxu0 0.0
    %322 = vmatpush1.msra.mxu0 0.0
    %323 = vmatprep.subr.mxu0 0.0
    %324 = vmatpush1.msra.mxu0 0.0
    %325 = vmatprep.subr.mxu0 0.0
    %326 = vmatpush1.msra.mxu0 0.0
    %327 = vmatprep.subr.mxu0 0.0
    %328 = vmatpush1.msra.mxu0 0.0
    %329 = vmatprep.subr.mxu0 0.0
    %330 = vmatpush1.msra.mxu0 0.0
    %331 = vmatprep.subr.mxu0 0.0
    %332 = vmatpush1.msra.mxu0 0.0
    %333 = vmatprep.subr.mxu0 0.0
    %334 = vmatpush1.msra.mxu0 0.0
    %335 = vmatprep.subr.mxu0 0.0
    %336 = vmatpush1.msra.mxu0 0.0
    %337 = vmatprep.subr.mxu0 0.0
    %338 = vmatpush1.msra.mxu0 0.0
    %339 = vmatprep.subr.mxu0 0.0
    %340 = vmatpush1.msra.mxu0 0.0
    %341 = vmatprep.mubr.f32.mxu0 0.0
    %342 = vmatmul.mubr.f32.gmra.mrb[0].mxu0 %v164
    %v343 = vpop.f32.mrb[0].mxu0
    %v344 = vadd.f32 0.0, %v343
    %v345 = vpop.f32.mrb[0].mxu0
    %346 = vmatprep.mubr.f32.mxu0 0.0
    %347 = vmatmul.mubr.f32.gmra.mrb[0].mxu0 %v165
    %v348 = vpop.f32.mrb[0].mxu0
    %v349 = vadd.f32 0.0, %v348
    %v350 = vpop.f32.mrb[0].mxu0
    %351 = vmatprep.mubr.f32.mxu0 0.0
    %352 = vmatmul.mubr.f32.gmra.mrb[0].mxu0 %v166
    %v353 = vpop.f32.mrb[0].mxu0
    %v354 = vadd.f32 0.0, %v353
    %v355 = vpop.f32.mrb[0].mxu0
    %356 = vmatprep.mubr.f32.mxu0 0.0
    %357 = vmatmul.mubr.f32.gmra.mrb[0].mxu0 %v167
    %v358 = vpop.f32.mrb[0].mxu0
    %v359 = vadd.f32 0.0, %v358
    %v360 = vpop.f32.mrb[0].mxu0
    %361 = vdwg.mxu0
    %vm362 = vcmask 130048
    %v364 = vsel %vm362, %v131, 0
    %v367 = vsel %vm362, %v132, 0
    %v370 = vsel %vm362, %v133, 0
    %v373 = vsel %vm362, %v134, 0
    %375 = vmatprep.subr.mxu0 0.0
    %376 = vmatpush1.msra.mxu0 %v253
    %377 = vmatprep.subr.mxu0 0.0
    %378 = vmatpush1.msra.mxu0 %v258
    %379 = vmatprep.subr.mxu0 0.0
    %380 = vmatpush1.msra.mxu0 0.0
    %381 = vmatprep.subr.mxu0 0.0
    %382 = vmatpush1.msra.mxu0 0.0
    %383 = vmatprep.subr.mxu0 0.0
    %384 = vmatpush1.msra.mxu0 0.0
    %385 = vmatprep.subr.mxu0 0.0
    %386 = vmatpush1.msra.mxu0 0.0
    %387 = vmatprep.subr.mxu0 0.0
    %388 = vmatpush1.msra.mxu0 0.0
    %389 = vmatprep.subr.mxu0 0.0
    %390 = vmatpush1.msra.mxu0 0.0
    %391 = vmatprep.subr.mxu0 0.0
    %392 = vmatpush1.msra.mxu0 0.0
    %393 = vmatprep.subr.mxu0 0.0
    %394 = vmatpush1.msra.mxu0 0.0
    %395 = vmatprep.subr.mxu0 0.0
    %396 = vmatpush1.msra.mxu0 0.0
    %397 = vmatprep.subr.mxu0 0.0
    %398 = vmatpush1.msra.mxu0 0.0
    %399 = vmatprep.subr.mxu0 0.0
    %400 = vmatpush1.msra.mxu0 0.0
    %401 = vmatprep.subr.mxu0 0.0
    %402 = vmatpush1.msra.mxu0 0.0
    %403 = vmatprep.subr.mxu0 0.0
    %404 = vmatpush1.msra.mxu0 0.0
    %405 = vmatprep.subr.mxu0 0.0
    %406 = vmatpush1.msra.mxu0 0.0
    %407 = vmatprep.subr.mxu0 0.0
    %408 = vmatpush1.msra.mxu0 0.0
    %409 = vmatprep.subr.mxu0 0.0
    %410 = vmatpush1.msra.mxu0 0.0
    %411 = vmatprep.subr.mxu0 0.0
    %412 = vmatpush1.msra.mxu0 0.0
    %413 = vmatprep.subr.mxu0 0.0
    %414 = vmatpush1.msra.mxu0 0.0
    %415 = vmatprep.subr.mxu0 0.0
    %416 = vmatpush1.msra.mxu0 0.0
    %417 = vmatprep.subr.mxu0 0.0
    %418 = vmatpush1.msra.mxu0 0.0
    %419 = vmatprep.subr.mxu0 0.0
    %420 = vmatpush1.msra.mxu0 0.0
    %421 = vmatprep.subr.mxu0 0.0
    %422 = vmatpush1.msra.mxu0 0.0
    %423 = vmatprep.subr.mxu0 0.0
    %424 = vmatpush1.msra.mxu0 0.0
    %425 = vmatprep.subr.mxu0 0.0
    %426 = vmatpush1.msra.mxu0 0.0
    %427 = vmatprep.subr.mxu0 0.0
    %428 = vmatpush1.msra.mxu0 0.0
    %429 = vmatprep.subr.mxu0 0.0
    %430 = vmatpush1.msra.mxu0 0.0
    %431 = vmatprep.subr.mxu0 0.0
    %432 = vmatpush1.msra.mxu0 0.0
    %433 = vmatprep.subr.mxu0 0.0
    %434 = vmatpush1.msra.mxu0 0.0
    %435 = vmatprep.subr.mxu0 0.0
    %436 = vmatpush1.msra.mxu0 0.0
    %437 = vmatprep.subr.mxu0 0.0
    %438 = vmatpush1.msra.mxu0 0.0
    %439 = vmatprep.mubr.f32.mxu0 0.0
    %440 = vmatmul.mubr.f32.gmra.mrb[0].mxu0 %v364
    %v441 = vpop.f32.mrb[0].mxu0
    %v442 = vadd.f32 %v344, %v441
    %v443 = vpop.f32.mrb[0].mxu0
    %444 = vmatprep.mubr.f32.mxu0 0.0
    %445 = vmatmul.mubr.f32.gmra.mrb[0].mxu0 %v367
    %v446 = vpop.f32.mrb[0].mxu0
    %v447 = vadd.f32 %v349, %v446
    %v448 = vpop.f32.mrb[0].mxu0
    %449 = vmatprep.mubr.f32.mxu0 0.0
    %450 = vmatmul.mubr.f32.gmra.mrb[0].mxu0 %v370
    %v451 = vpop.f32.mrb[0].mxu0
    %v452 = vadd.f32 %v354, %v451
    %v453 = vpop.f32.mrb[0].mxu0
    %454 = vmatprep.mubr.f32.mxu0 0.0
    %455 = vmatmul.mubr.f32.gmra.mrb[0].mxu0 %v373
    %v456 = vpop.f32.mrb[0].mxu0
    %v457 = vadd.f32 %v359, %v456
    %v458 = vpop.f32.mrb[0].mxu0
    %459 = vdwg.mxu0
    %v460 = vld [vmem:[%s7] sm:$0x1]
    %v462 = vlaneseq
    %v463 = vshrl.u32 %v462, 7
    %v464 = vsub.s32 0, %v463
    %v465 = vrot.slane %v460, %v464
    %v467 = vadd.f32 %v442, %v465
    %v468 = vadd.f32 %v447, %v465
    %v469 = vadd.f32 %v452, %v465
    %v470 = vadd.f32 %v457, %v465
    %v471 = vmax.f32 %v467, 0.0
    %v472 = vmax.f32 %v468, 0.0
    %v473 = vmax.f32 %v469, 0.0
    %v474 = vmax.f32 %v470, 0.0
    %vm475 = vcmask 261120
    %v477 = vsel %vm475, %v147, 0
    %v480 = vsel %vm475, %v148, 0
    %482 = vmatprep.subr.mxu0 0.0
    %483 = vmatpush1.msra.mxu0 %v471
    %484 = vmatprep.subr.mxu0 0.0
    %485 = vmatpush1.msra.mxu0 %v472
    %486 = vmatprep.subr.mxu0 0.0
    %487 = vmatpush1.msra.mxu0 %v473
    %488 = vmatprep.subr.mxu0 0.0
    %489 = vmatpush1.msra.mxu0 %v474
    %490 = vmatprep.subr.mxu0 0.0
    %491 = vmatpush1.msra.mxu0 0.0
    %492 = vmatprep.subr.mxu0 0.0
    %493 = vmatpush1.msra.mxu0 0.0
    %494 = vmatprep.subr.mxu0 0.0
    %495 = vmatpush1.msra.mxu0 0.0
    %496 = vmatprep.subr.mxu0 0.0
    %497 = vmatpush1.msra.mxu0 0.0
    %498 = vmatprep.subr.mxu0 0.0
    %499 = vmatpush1.msra.mxu0 0.0
    %500 = vmatprep.subr.mxu0 0.0
    %501 = vmatpush1.msra.mxu0 0.0
    %502 = vmatprep.subr.mxu0 0.0
    %503 = vmatpush1.msra.mxu0 0.0
    %504 = vmatprep.subr.mxu0 0.0
    %505 = vmatpush1.msra.mxu0 0.0
    %506 = vmatprep.subr.mxu0 0.0
    %507 = vmatpush1.msra.mxu0 0.0
    %508 = vmatprep.subr.mxu0 0.0
    %509 = vmatpush1.msra.mxu0 0.0
    %510 = vmatprep.subr.mxu0 0.0
    %511 = vmatpush1.msra.mxu0 0.0
    %512 = vmatprep.subr.mxu0 0.0
    %513 = vmatpush1.msra.mxu0 0.0
    %514 = vmatprep.subr.mxu0 0.0
    %515 = vmatpush1.msra.mxu0 0.0
    %516 = vmatprep.subr.mxu0 0.0
    %517 = vmatpush1.msra.mxu0 0.0
    %518 = vmatprep.subr.mxu0 0.0
    %519 = vmatpush1.msra.mxu0 0.0
    %520 = vmatprep.subr.mxu0 0.0
    %521 = vmatpush1.msra.mxu0 0.0
    %522 = vmatprep.subr.mxu0 0.0
    %523 = vmatpush1.msra.mxu0 0.0
    %524 = vmatprep.subr.mxu0 0.0
    %525 = vmatpush1.msra.mxu0 0.0
    %526 = vmatprep.subr.mxu0 0.0
    %527 = vmatpush1.msra.mxu0 0.0
    %528 = vmatprep.subr.mxu0 0.0
    %529 = vmatpush1.msra.mxu0 0.0
    %530 = vmatprep.subr.mxu0 0.0
    %531 = vmatpush1.msra.mxu0 0.0
    %532 = vmatprep.subr.mxu0 0.0
    %533 = vmatpush1.msra.mxu0 0.0
    %534 = vmatprep.subr.mxu0 0.0
    %535 = vmatpush1.msra.mxu0 0.0
    %536 = vmatprep.subr.mxu0 0.0
    %537 = vmatpush1.msra.mxu0 0.0
    %538 = vmatprep.subr.mxu0 0.0
    %539 = vmatpush1.msra.mxu0 0.0
    %540 = vmatprep.subr.mxu0 0.0
    %541 = vmatpush1.msra.mxu0 0.0
    %542 = vmatprep.subr.mxu0 0.0
    %543 = vmatpush1.msra.mxu0 0.0
    %544 = vmatprep.subr.mxu0 0.0
    %545 = vmatpush1.msra.mxu0 0.0
    %546 = vmatprep.mubr.f32.mxu0 0.0
    %547 = vmatmul.mubr.f32.gmra.mrb[0].mxu0 %v477
    %v548 = vpop.f32.mrb[0].mxu0
    %v549 = vadd.f32 0.0, %v548
    %v550 = vpop.f32.mrb[0].mxu0
    %551 = vmatprep.mubr.f32.mxu0 0.0
    %552 = vmatmul.mubr.f32.gmra.mrb[0].mxu0 %v480
    %v553 = vpop.f32.mrb[0].mxu0
    %v554 = vadd.f32 0.0, %v553
    %v555 = vpop.f32.mrb[0].mxu0
    %556 = vdwg.mxu0
    %v557 = vld [vmem:[#allocation6] sm:$0xff]
    %v558 = vld [vmem:[#allocation6 + $0x8] sm:$0xff]
    %v559 = vld [vmem:[#allocation6 + $0x10] sm:$0xff]
    %v560 = vld [vmem:[#allocation6 + $0x18] sm:$0xff]
    %v561 = vld [vmem:[#allocation6 + $0x20] sm:$0xff]
    %v562 = vld [vmem:[#allocation6 + $0x28] sm:$0xff]
    %v563 = vld [vmem:[#allocation6 + $0x30] sm:$0xff]
    %v564 = vld [vmem:[#allocation6 + $0x38] sm:$0xff]
    %v565 = vld [vmem:[#allocation6 + $0x40] sm:$0xff]
    %v566 = vld [vmem:[#allocation6 + $0x48] sm:$0xff]
    %v567 = vld [vmem:[#allocation6 + $0x50] sm:$0xff]
    %v568 = vld [vmem:[#allocation6 + $0x58] sm:$0xff]
    %v569 = vld [vmem:[#allocation6 + $0x60] sm:$0xff]
    %v570 = vld [vmem:[#allocation6 + $0x68] sm:$0xff]
    %v571 = vld [vmem:[#allocation6 + $0x70] sm:$0xff]
    %v572 = vld [vmem:[#allocation6 + $0x78] sm:$0xff]
    %v573 = vld [vmem:[#allocation7] sm:$0xff]
    %v574 = vld [vmem:[#allocation7 + $0x8] sm:$0xff]
    %v575 = vld [vmem:[#allocation7 + $0x10] sm:$0xff]
    %v576 = vld [vmem:[#allocation7 + $0x18] sm:$0xff]
    %v577 = vld [vmem:[#allocation7 + $0x20] sm:$0xff]
    %v578 = vld [vmem:[#allocation7 + $0x28] sm:$0xff]
    %v579 = vld [vmem:[#allocation7 + $0x30] sm:$0xff]
    %v580 = vld [vmem:[#allocation7 + $0x38] sm:$0xff]
    %v581 = vld [vmem:[#allocation7 + $0x40] sm:$0xff]
    %v582 = vld [vmem:[#allocation7 + $0x48] sm:$0xff]
    %v583 = vld [vmem:[#allocation7 + $0x50] sm:$0xff]
    %v584 = vld [vmem:[#allocation7 + $0x58] sm:$0xff]
    %v585 = vld [vmem:[#allocation7 + $0x60] sm:$0xff]
    %v586 = vld [vmem:[#allocation7 + $0x68] sm:$0xff]
    %v587 = vld [vmem:[#allocation7 + $0x70] sm:$0xff]
    %v588 = vld [vmem:[#allocation7 + $0x78] sm:$0xff]
    %589 = vmatprep.subr.mxu0 0.0
    %590 = vmatpush1.msra.mxu0 %v573
    %591 = vmatprep.subr.mxu0 0.0
    %592 = vmatpush1.msra.mxu0 %v574
    %593 = vmatprep.subr.mxu0 0.0
    %594 = vmatpush1.msra.mxu0 %v575
    %595 = vmatprep.subr.mxu0 0.0
    %596 = vmatpush1.msra.mxu0 %v576
    %597 = vmatprep.subr.mxu0 0.0
    %598 = vmatpush1.msra.mxu0 %v577
    %599 = vmatprep.subr.mxu0 0.0
    %600 = vmatpush1.msra.mxu0 %v578
    %601 = vmatprep.subr.mxu0 0.0
    %602 = vmatpush1.msra.mxu0 %v579
    %603 = vmatprep.subr.mxu0 0.0
    %604 = vmatpush1.msra.mxu0 %v580
    %605 = vmatprep.subr.mxu0 0.0
    %606 = vmatpush1.msra.mxu0 %v581
    %607 = vmatprep.subr.mxu0 0.0
    %608 = vmatpush1.msra.mxu0 %v582
    %609 = vmatprep.subr.mxu0 0.0
    %610 = vmatpush1.msra.mxu0 %v583
    %611 = vmatprep.subr.mxu0 0.0
    %612 = vmatpush1.msra.mxu0 %v584
    %613 = vmatprep.subr.mxu0 0.0
    %614 = vmatpush1.msra.mxu0 %v585
    %615 = vmatprep.subr.mxu0 0.0
    %616 = vmatpush1.msra.mxu0 %v586
    %617 = vmatprep.subr.mxu0 0.0
    %618 = vmatpush1.msra.mxu0 %v587
    %619 = vmatprep.subr.mxu0 0.0
    %620 = vmatpush1.msra.mxu0 %v588
    %621 = vmatprep.subr.mxu0 0.0
    %622 = vmatpush1.msra.mxu0 0.0
    %623 = vmatprep.subr.mxu0 0.0
    %624 = vmatpush1.msra.mxu0 0.0
    %625 = vmatprep.subr.mxu0 0.0
    %626 = vmatpush1.msra.mxu0 0.0
    %627 = vmatprep.subr.mxu0 0.0
    %628 = vmatpush1.msra.mxu0 0.0
    %629 = vmatprep.subr.mxu0 0.0
    %630 = vmatpush1.msra.mxu0 0.0
    %631 = vmatprep.subr.mxu0 0.0
    %632 = vmatpush1.msra.mxu0 0.0
    %633 = vmatprep.subr.mxu0 0.0
    %634 = vmatpush1.msra.mxu0 0.0
    %635 = vmatprep.subr.mxu0 0.0
    %636 = vmatpush1.msra.mxu0 0.0
    %637 = vmatprep.subr.mxu0 0.0
    %638 = vmatpush1.msra.mxu0 0.0
    %639 = vmatprep.subr.mxu0 0.0
    %640 = vmatpush1.msra.mxu0 0.0
    %641 = vmatprep.subr.mxu0 0.0
    %642 = vmatpush1.msra.mxu0 0.0
    %643 = vmatprep.subr.mxu0 0.0
    %644 = vmatpush1.msra.mxu0 0.0
    %645 = vmatprep.subr.mxu0 0.0
    %646 = vmatpush1.msra.mxu0 0.0
    %647 = vmatprep.subr.mxu0 0.0
    %648 = vmatpush1.msra.mxu0 0.0
    %649 = vmatprep.subr.mxu0 0.0
    %650 = vmatpush1.msra.mxu0 0.0
    %651 = vmatprep.subr.mxu0 0.0
    %652 = vmatpush1.msra.mxu0 0.0
    %653 = vmatprep.mubr.f32.mxu0 0.0
    %654 = vmatmul.mubr.f32.gmra.mrb[0].mxu0 %v549
    %v655 = vpop.f32.mrb[0].mxu0
    %v656 = vadd.f32 0.0, %v655
    %v657 = vpop.f32.mrb[0].mxu0
    %658 = vmatprep.mubr.f32.mxu0 0.0
    %659 = vmatmul.mubr.f32.gmra.mrb[0].mxu0 %v554
    %v660 = vpop.f32.mrb[0].mxu0
    %v661 = vadd.f32 0.0, %v660
    %v662 = vpop.f32.mrb[0].mxu0
    %663 = vdwg.mxu0
    %664 = vmatprep.subr.mxu0 0.0
    %665 = vmatpush1.msra.mxu0 %v557
    %666 = vmatprep.subr.mxu0 0.0
    %667 = vmatpush1.msra.mxu0 %v558
    %668 = vmatprep.subr.mxu0 0.0
    %669 = vmatpush1.msra.mxu0 %v559
    %670 = vmatprep.subr.mxu0 0.0
    %671 = vmatpush1.msra.mxu0 %v560
    %672 = vmatprep.subr.mxu0 0.0
    %673 = vmatpush1.msra.mxu0 %v561
    %674 = vmatprep.subr.mxu0 0.0
    %675 = vmatpush1.msra.mxu0 %v562
    %676 = vmatprep.subr.mxu0 0.0
    %677 = vmatpush1.msra.mxu0 %v563
    %678 = vmatprep.subr.mxu0 0.0
    %679 = vmatpush1.msra.mxu0 %v564
    %680 = vmatprep.subr.mxu0 0.0
    %681 = vmatpush1.msra.mxu0 %v565
    %682 = vmatprep.subr.mxu0 0.0
    %683 = vmatpush1.msra.mxu0 %v566
    %684 = vmatprep.subr.mxu0 0.0
    %685 = vmatpush1.msra.mxu0 %v567
    %686 = vmatprep.subr.mxu0 0.0
    %687 = vmatpush1.msra.mxu0 %v568
    %688 = vmatprep.subr.mxu0 0.0
    %689 = vmatpush1.msra.mxu0 %v569
    %690 = vmatprep.subr.mxu0 0.0
    %691 = vmatpush1.msra.mxu0 %v570
    %692 = vmatprep.subr.mxu0 0.0
    %693 = vmatpush1.msra.mxu0 %v571
    %694 = vmatprep.subr.mxu0 0.0
    %695 = vmatpush1.msra.mxu0 %v572
    %696 = vmatprep.subr.mxu0 0.0
    %697 = vmatpush1.msra.mxu0 0.0
    %698 = vmatprep.subr.mxu0 0.0
    %699 = vmatpush1.msra.mxu0 0.0
    %700 = vmatprep.subr.mxu0 0.0
    %701 = vmatpush1.msra.mxu0 0.0
    %702 = vmatprep.subr.mxu0 0.0
    %703 = vmatpush1.msra.mxu0 0.0
    %704 = vmatprep.subr.mxu0 0.0
    %705 = vmatpush1.msra.mxu0 0.0
    %706 = vmatprep.subr.mxu0 0.0
    %707 = vmatpush1.msra.mxu0 0.0
    %708 = vmatprep.subr.mxu0 0.0
    %709 = vmatpush1.msra.mxu0 0.0
    %710 = vmatprep.subr.mxu0 0.0
    %711 = vmatpush1.msra.mxu0 0.0
    %712 = vmatprep.subr.mxu0 0.0
    %713 = vmatpush1.msra.mxu0 0.0
    %714 = vmatprep.subr.mxu0 0.0
    %715 = vmatpush1.msra.mxu0 0.0
    %716 = vmatprep.subr.mxu0 0.0
    %717 = vmatpush1.msra.mxu0 0.0
    %718 = vmatprep.subr.mxu0 0.0
    %719 = vmatpush1.msra.mxu0 0.0
    %720 = vmatprep.subr.mxu0 0.0
    %721 = vmatpush1.msra.mxu0 0.0
    %722 = vmatprep.subr.mxu0 0.0
    %723 = vmatpush1.msra.mxu0 0.0
    %724 = vmatprep.subr.mxu0 0.0
    %725 = vmatpush1.msra.mxu0 0.0
    %726 = vmatprep.subr.mxu0 0.0
    %727 = vmatpush1.msra.mxu0 0.0
    %728 = vmatprep.mubr.f32.mxu0 0.0
    %729 = vmatmul.mubr.f32.gmra.mrb[0].mxu0 %v168
    %v730 = vpop.f32.mrb[0].mxu0
    %v731 = vadd.f32 %v656, %v730
    %v732 = vpop.f32.mrb[0].mxu0
    %733 = vmatprep.mubr.f32.mxu0 0.0
    %734 = vmatmul.mubr.f32.gmra.mrb[0].mxu0 %v169
    %v735 = vpop.f32.mrb[0].mxu0
    %v736 = vadd.f32 %v661, %v735
    %v737 = vpop.f32.mrb[0].mxu0
    %738 = vdwg.mxu0
    %v739 = vld [vmem:[%s10] sm:$0x1]
    %v741 = vlaneseq
    %v742 = vshrl.u32 %v741, 7
    %v743 = vsub.s32 0, %v742
    %v744 = vrot.slane %v739, %v743
    %v746 = vadd.f32 %v731, %v744
    %v747 = vadd.f32 %v736, %v744
    %v748 = vmax.f32 %v746, 0.0
    %v749 = vmax.f32 %v747, 0.0
    %s750 = scalar_lea.vmem [#allocation2], 128
    %v751 = vld [vmem:[%s750] sm:$0xff]
    %v752 = vld [vmem:[%s750 + $0x8] sm:$0xff]
    %v753 = vld [vmem:[%s750 + $0x10] sm:$0xff]
    %v754 = vld [vmem:[%s750 + $0x18] sm:$0xff]
    %v755 = vld [vmem:[%s750 + $0x20] sm:$0xff]
    %v756 = vld [vmem:[%s750 + $0x28] sm:$0xff]
    %v757 = vld [vmem:[%s750 + $0x30] sm:$0xff]
    %v758 = vld [vmem:[%s750 + $0x38] sm:$0xff]
    %v759 = vld [vmem:[%s750 + $0x40] sm:$0xff]
    %v760 = vld [vmem:[%s750 + $0x48] sm:$0xff]
    %v761 = vld [vmem:[%s750 + $0x50] sm:$0xff]
    %v762 = vld [vmem:[%s750 + $0x58] sm:$0xff]
    %v763 = vld [vmem:[%s750 + $0x60] sm:$0xff]
    %v764 = vld [vmem:[%s750 + $0x68] sm:$0xff]
    %v765 = vld [vmem:[%s750 + $0x70] sm:$0xff]
    %v766 = vld [vmem:[%s750 + $0x78] sm:$0xff]
    %767 = vmatprep.subr.mxu0 0.0
    %768 = vmatpush1.msra.mxu0 %v751
    %769 = vmatprep.subr.mxu0 0.0
    %770 = vmatpush1.msra.mxu0 %v752
    %771 = vmatprep.subr.mxu0 0.0
    %772 = vmatpush1.msra.mxu0 %v753
    %773 = vmatprep.subr.mxu0 0.0
    %774 = vmatpush1.msra.mxu0 %v754
    %775 = vmatprep.subr.mxu0 0.0
    %776 = vmatpush1.msra.mxu0 %v755
    %777 = vmatprep.subr.mxu0 0.0
    %778 = vmatpush1.msra.mxu0 %v756
    %779 = vmatprep.subr.mxu0 0.0
    %780 = vmatpush1.msra.mxu0 %v757
    %781 = vmatprep.subr.mxu0 0.0
    %782 = vmatpush1.msra.mxu0 %v758
    %783 = vmatprep.subr.mxu0 0.0
    %784 = vmatpush1.msra.mxu0 %v759
    %785 = vmatprep.subr.mxu0 0.0
    %786 = vmatpush1.msra.mxu0 %v760
    %787 = vmatprep.subr.mxu0 0.0
    %788 = vmatpush1.msra.mxu0 %v761
    %789 = vmatprep.subr.mxu0 0.0
    %790 = vmatpush1.msra.mxu0 %v762
    %791 = vmatprep.subr.mxu0 0.0
    %792 = vmatpush1.msra.mxu0 %v763
    %793 = vmatprep.subr.mxu0 0.0
    %794 = vmatpush1.msra.mxu0 %v764
    %795 = vmatprep.subr.mxu0 0.0
    %796 = vmatpush1.msra.mxu0 %v765
    %797 = vmatprep.subr.mxu0 0.0
    %798 = vmatpush1.msra.mxu0 %v766
    %799 = vmatprep.subr.mxu0 0.0
    %800 = vmatpush1.msra.mxu0 0.0
    %801 = vmatprep.subr.mxu0 0.0
    %802 = vmatpush1.msra.mxu0 0.0
    %803 = vmatprep.subr.mxu0 0.0
    %804 = vmatpush1.msra.mxu0 0.0
    %805 = vmatprep.subr.mxu0 0.0
    %806 = vmatpush1.msra.mxu0 0.0
    %807 = vmatprep.subr.mxu0 0.0
    %808 = vmatpush1.msra.mxu0 0.0
    %809 = vmatprep.subr.mxu0 0.0
    %810 = vmatpush1.msra.mxu0 0.0
    %811 = vmatprep.subr.mxu0 0.0
    %812 = vmatpush1.msra.mxu0 0.0
    %813 = vmatprep.subr.mxu0 0.0
    %814 = vmatpush1.msra.mxu0 0.0
    %815 = vmatprep.subr.mxu0 0.0
    %816 = vmatpush1.msra.mxu0 0.0
    %817 = vmatprep.subr.mxu0 0.0
    %818 = vmatpush1.msra.mxu0 0.0
    %819 = vmatprep.subr.mxu0 0.0
    %820 = vmatpush1.msra.mxu0 0.0
    %821 = vmatprep.subr.mxu0 0.0
    %822 = vmatpush1.msra.mxu0 0.0
    %823 = vmatprep.subr.mxu0 0.0
    %824 = vmatpush1.msra.mxu0 0.0
    %825 = vmatprep.subr.mxu0 0.0
    %826 = vmatpush1.msra.mxu0 0.0
    %827 = vmatprep.subr.mxu0 0.0
    %828 = vmatpush1.msra.mxu0 0.0
    %829 = vmatprep.subr.mxu0 0.0
    %830 = vmatpush1.msra.mxu0 0.0
    %831 = vmatprep.mubr.f32.mxu0 0.0
    %832 = vmatmul.mubr.f32.gmra.mrb[0].mxu0 %v748
    %v833 = vpop.f32.mrb[0].mxu0
    %v834 = vadd.f32 0.0, %v833
    %v835 = vpop.f32.mrb[0].mxu0
    %836 = vmatprep.mubr.f32.mxu0 0.0
    %837 = vmatmul.mubr.f32.gmra.mrb[0].mxu0 %v749
    %v838 = vpop.f32.mrb[0].mxu0
    %v839 = vadd.f32 0.0, %v838
    %v840 = vpop.f32.mrb[0].mxu0
    %841 = vdwg.mxu0
    %s842 = scalar_lea.vmem [#allocation4], 128
    %v843 = vld [vmem:[%s842] sm:$0xff]
    %v844 = vld [vmem:[%s842 + $0x8] sm:$0xff]
    %v845 = vld [vmem:[%s842 + $0x10] sm:$0xff]
    %v846 = vld [vmem:[%s842 + $0x18] sm:$0xff]
    %v847 = vld [vmem:[%s842 + $0x20] sm:$0xff]
    %v848 = vld [vmem:[%s842 + $0x28] sm:$0xff]
    %v849 = vld [vmem:[%s842 + $0x30] sm:$0xff]
    %v850 = vld [vmem:[%s842 + $0x38] sm:$0xff]
    %v851 = vld [vmem:[%s842 + $0x40] sm:$0xff]
    %v852 = vld [vmem:[%s842 + $0x48] sm:$0xff]
    %v853 = vld [vmem:[%s842 + $0x50] sm:$0xff]
    %v854 = vld [vmem:[%s842 + $0x58] sm:$0xff]
    %v855 = vld [vmem:[%s842 + $0x60] sm:$0xff]
    %v856 = vld [vmem:[%s842 + $0x68] sm:$0xff]
    %v857 = vld [vmem:[%s842 + $0x70] sm:$0xff]
    %v858 = vld [vmem:[%s842 + $0x78] sm:$0xff]
    %859 = vmatprep.subr.mxu0 0.0
    %860 = vmatpush1.msra.mxu0 %v843
    %861 = vmatprep.subr.mxu0 0.0
    %862 = vmatpush1.msra.mxu0 %v844
    %863 = vmatprep.subr.mxu0 0.0
    %864 = vmatpush1.msra.mxu0 %v845
    %865 = vmatprep.subr.mxu0 0.0
    %866 = vmatpush1.msra.mxu0 %v846
    %867 = vmatprep.subr.mxu0 0.0
    %868 = vmatpush1.msra.mxu0 %v847
    %869 = vmatprep.subr.mxu0 0.0
    %870 = vmatpush1.msra.mxu0 %v848
    %871 = vmatprep.subr.mxu0 0.0
    %872 = vmatpush1.msra.mxu0 %v849
    %873 = vmatprep.subr.mxu0 0.0
    %874 = vmatpush1.msra.mxu0 %v850
    %875 = vmatprep.subr.mxu0 0.0
    %876 = vmatpush1.msra.mxu0 %v851
    %877 = vmatprep.subr.mxu0 0.0
    %878 = vmatpush1.msra.mxu0 %v852
    %879 = vmatprep.subr.mxu0 0.0
    %880 = vmatpush1.msra.mxu0 %v853
    %881 = vmatprep.subr.mxu0 0.0
    %882 = vmatpush1.msra.mxu0 %v854
    %883 = vmatprep.subr.mxu0 0.0
    %884 = vmatpush1.msra.mxu0 %v855
    %885 = vmatprep.subr.mxu0 0.0
    %886 = vmatpush1.msra.mxu0 %v856
    %887 = vmatprep.subr.mxu0 0.0
    %888 = vmatpush1.msra.mxu0 %v857
    %889 = vmatprep.subr.mxu0 0.0
    %890 = vmatpush1.msra.mxu0 %v858
    %891 = vmatprep.subr.mxu0 0.0
    %892 = vmatpush1.msra.mxu0 0.0
    %893 = vmatprep.subr.mxu0 0.0
    %894 = vmatpush1.msra.mxu0 0.0
    %895 = vmatprep.subr.mxu0 0.0
    %896 = vmatpush1.msra.mxu0 0.0
    %897 = vmatprep.subr.mxu0 0.0
    %898 = vmatpush1.msra.mxu0 0.0
    %899 = vmatprep.subr.mxu0 0.0
    %900 = vmatpush1.msra.mxu0 0.0
    %901 = vmatprep.subr.mxu0 0.0
    %902 = vmatpush1.msra.mxu0 0.0
    %903 = vmatprep.subr.mxu0 0.0
    %904 = vmatpush1.msra.mxu0 0.0
    %905 = vmatprep.subr.mxu0 0.0
    %906 = vmatpush1.msra.mxu0 0.0
    %907 = vmatprep.subr.mxu0 0.0
    %908 = vmatpush1.msra.mxu0 0.0
    %909 = vmatprep.subr.mxu0 0.0
    %910 = vmatpush1.msra.mxu0 0.0
    %911 = vmatprep.subr.mxu0 0.0
    %912 = vmatpush1.msra.mxu0 0.0
    %913 = vmatprep.subr.mxu0 0.0
    %914 = vmatpush1.msra.mxu0 0.0
    %915 = vmatprep.subr.mxu0 0.0
    %916 = vmatpush1.msra.mxu0 0.0
    %917 = vmatprep.subr.mxu0 0.0
    %918 = vmatpush1.msra.mxu0 0.0
    %919 = vmatprep.subr.mxu0 0.0
    %920 = vmatpush1.msra.mxu0 0.0
    %921 = vmatprep.subr.mxu0 0.0
    %922 = vmatpush1.msra.mxu0 0.0
    %923 = vmatprep.mubr.f32.mxu0 0.0
    %924 = vmatmul.mubr.f32.gmra.mrb[0].mxu0 %v164
    %v925 = vpop.f32.mrb[0].mxu0
    %v926 = vadd.f32 0.0, %v925
    %v927 = vpop.f32.mrb[0].mxu0
    %928 = vmatprep.mubr.f32.mxu0 0.0
    %929 = vmatmul.mubr.f32.gmra.mrb[0].mxu0 %v165
    %v930 = vpop.f32.mrb[0].mxu0
    %v931 = vadd.f32 0.0, %v930
    %v932 = vpop.f32.mrb[0].mxu0
    %933 = vmatprep.mubr.f32.mxu0 0.0
    %934 = vmatmul.mubr.f32.gmra.mrb[0].mxu0 %v166
    %v935 = vpop.f32.mrb[0].mxu0
    %v936 = vadd.f32 0.0, %v935
    %v937 = vpop.f32.mrb[0].mxu0
    %938 = vmatprep.mubr.f32.mxu0 0.0
    %939 = vmatmul.mubr.f32.gmra.mrb[0].mxu0 %v167
    %v940 = vpop.f32.mrb[0].mxu0
    %v941 = vadd.f32 0.0, %v940
    %v942 = vpop.f32.mrb[0].mxu0
    %943 = vdwg.mxu0
    %944 = vmatprep.subr.mxu0 0.0
    %945 = vmatpush1.msra.mxu0 %v834
    %946 = vmatprep.subr.mxu0 0.0
    %947 = vmatpush1.msra.mxu0 %v839
    %948 = vmatprep.subr.mxu0 0.0
    %949 = vmatpush1.msra.mxu0 0.0
    %950 = vmatprep.subr.mxu0 0.0
    %951 = vmatpush1.msra.mxu0 0.0
    %952 = vmatprep.subr.mxu0 0.0
    %953 = vmatpush1.msra.mxu0 0.0
    %954 = vmatprep.subr.mxu0 0.0
    %955 = vmatpush1.msra.mxu0 0.0
    %956 = vmatprep.subr.mxu0 0.0
    %957 = vmatpush1.msra.mxu0 0.0
    %958 = vmatprep.subr.mxu0 0.0
    %959 = vmatpush1.msra.mxu0 0.0
    %960 = vmatprep.subr.mxu0 0.0
    %961 = vmatpush1.msra.mxu0 0.0
    %962 = vmatprep.subr.mxu0 0.0
    %963 = vmatpush1.msra.mxu0 0.0
    %964 = vmatprep.subr.mxu0 0.0
    %965 = vmatpush1.msra.mxu0 0.0
    %966 = vmatprep.subr.mxu0 0.0
    %967 = vmatpush1.msra.mxu0 0.0
    %968 = vmatprep.subr.mxu0 0.0
    %969 = vmatpush1.msra.mxu0 0.0
    %970 = vmatprep.subr.mxu0 0.0
    %971 = vmatpush1.msra.mxu0 0.0
    %972 = vmatprep.subr.mxu0 0.0
    %973 = vmatpush1.msra.mxu0 0.0
    %974 = vmatprep.subr.mxu0 0.0
    %975 = vmatpush1.msra.mxu0 0.0
    %976 = vmatprep.subr.mxu0 0.0
    %977 = vmatpush1.msra.mxu0 0.0
    %978 = vmatprep.subr.mxu0 0.0
    %979 = vmatpush1.msra.mxu0 0.0
    %980 = vmatprep.subr.mxu0 0.0
    %981 = vmatpush1.msra.mxu0 0.0
    %982 = vmatprep.subr.mxu0 0.0
    %983 = vmatpush1.msra.mxu0 0.0
    %984 = vmatprep.subr.mxu0 0.0
    %985 = vmatpush1.msra.mxu0 0.0
    %986 = vmatprep.subr.mxu0 0.0
    %987 = vmatpush1.msra.mxu0 0.0
    %988 = vmatprep.subr.mxu0 0.0
    %989 = vmatpush1.msra.mxu0 0.0
    %990 = vmatprep.subr.mxu0 0.0
    %991 = vmatpush1.msra.mxu0 0.0
    %992 = vmatprep.subr.mxu0 0.0
    %993 = vmatpush1.msra.mxu0 0.0
    %994 = vmatprep.subr.mxu0 0.0
    %995 = vmatpush1.msra.mxu0 0.0
    %996 = vmatprep.subr.mxu0 0.0
    %997 = vmatpush1.msra.mxu0 0.0
    %998 = vmatprep.subr.mxu0 0.0
    %999 = vmatpush1.msra.mxu0 0.0
    %1000 = vmatprep.subr.mxu0 0.0
    %1001 = vmatpush1.msra.mxu0 0.0
    %1002 = vmatprep.subr.mxu0 0.0
    %1003 = vmatpush1.msra.mxu0 0.0
    %1004 = vmatprep.subr.mxu0 0.0
    %1005 = vmatpush1.msra.mxu0 0.0
    %1006 = vmatprep.subr.mxu0 0.0
    %1007 = vmatpush1.msra.mxu0 0.0
    %1008 = vmatprep.mubr.f32.mxu0 0.0
    %1009 = vmatmul.mubr.f32.gmra.mrb[0].mxu0 %v364
    %v1010 = vpop.f32.mrb[0].mxu0
    %v1011 = vadd.f32 %v926, %v1010
    %v1012 = vpop.f32.mrb[0].mxu0
    %1013 = vmatprep.mubr.f32.mxu0 0.0
    %1014 = vmatmul.mubr.f32.gmra.mrb[0].mxu0 %v367
    %v1015 = vpop.f32.mrb[0].mxu0
    %v1016 = vadd.f32 %v931, %v1015
    %v1017 = vpop.f32.mrb[0].mxu0
    %1018 = vmatprep.mubr.f32.mxu0 0.0
    %1019 = vmatmul.mubr.f32.gmra.mrb[0].mxu0 %v370
    %v1020 = vpop.f32.mrb[0].mxu0
    %v1021 = vadd.f32 %v936, %v1020
    %v1022 = vpop.f32.mrb[0].mxu0
    %1023 = vmatprep.mubr.f32.mxu0 0.0
    %1024 = vmatmul.mubr.f32.gmra.mrb[0].mxu0 %v373
    %v1025 = vpop.f32.mrb[0].mxu0
    %v1026 = vadd.f32 %v941, %v1025
    %v1027 = vpop.f32.mrb[0].mxu0
    %1028 = vdwg.mxu0
    %s1029 = scalar_lea.vmem %s7, 1
    %v1030 = vld [vmem:[%s1029] sm:$0x1]
    %v1032 = vlaneseq
    %v1033 = vshrl.u32 %v1032, 7
    %v1034 = vsub.s32 0, %v1033
    %v1035 = vrot.slane %v1030, %v1034
    %v1037 = vadd.f32 %v1011, %v1035
    %v1038 = vadd.f32 %v1016, %v1035
    %v1039 = vadd.f32 %v1021, %v1035
    %v1040 = vadd.f32 %v1026, %v1035
    %v1041 = vmax.f32 %v1037, 0.0
    %v1042 = vmax.f32 %v1038, 0.0
    %v1043 = vmax.f32 %v1039, 0.0
    %v1044 = vmax.f32 %v1040, 0.0
    %1045 = vmatprep.subr.mxu0 0.0
    %1046 = vmatpush1.msra.mxu0 %v1041
    %1047 = vmatprep.subr.mxu0 0.0
    %1048 = vmatpush1.msra.mxu0 %v1042
    %1049 = vmatprep.subr.mxu0 0.0
    %1050 = vmatpush1.msra.mxu0 %v1043
    %1051 = vmatprep.subr.mxu0 0.0
    %1052 = vmatpush1.msra.mxu0 %v1044
    %1053 = vmatprep.subr.mxu0 0.0
    %1054 = vmatpush1.msra.mxu0 0.0
    %1055 = vmatprep.subr.mxu0 0.0
    %1056 = vmatpush1.msra.mxu0 0.0
    %1057 = vmatprep.subr.mxu0 0.0
    %1058 = vmatpush1.msra.mxu0 0.0
    %1059 = vmatprep.subr.mxu0 0.0
    %1060 = vmatpush1.msra.mxu0 0.0
    %1061 = vmatprep.subr.mxu0 0.0
    %1062 = vmatpush1.msra.mxu0 0.0
    %1063 = vmatprep.subr.mxu0 0.0
    %1064 = vmatpush1.msra.mxu0 0.0
    %1065 = vmatprep.subr.mxu0 0.0
    %1066 = vmatpush1.msra.mxu0 0.0
    %1067 = vmatprep.subr.mxu0 0.0
    %1068 = vmatpush1.msra.mxu0 0.0
    %1069 = vmatprep.subr.mxu0 0.0
    %1070 = vmatpush1.msra.mxu0 0.0
    %1071 = vmatprep.subr.mxu0 0.0
    %1072 = vmatpush1.msra.mxu0 0.0
    %1073 = vmatprep.subr.mxu0 0.0
    %1074 = vmatpush1.msra.mxu0 0.0
    %1075 = vmatprep.subr.mxu0 0.0
    %1076 = vmatpush1.msra.mxu0 0.0
    %1077 = vmatprep.subr.mxu0 0.0
    %1078 = vmatpush1.msra.mxu0 0.0
    %1079 = vmatprep.subr.mxu0 0.0
    %1080 = vmatpush1.msra.mxu0 0.0
    %1081 = vmatprep.subr.mxu0 0.0
    %1082 = vmatpush1.msra.mxu0 0.0
    %1083 = vmatprep.subr.mxu0 0.0
    %1084 = vmatpush1.msra.mxu0 0.0
    %1085 = vmatprep.subr.mxu0 0.0
    %1086 = vmatpush1.msra.mxu0 0.0
    %1087 = vmatprep.subr.mxu0 0.0
    %1088 = vmatpush1.msra.mxu0 0.0
    %1089 = vmatprep.subr.mxu0 0.0
    %1090 = vmatpush1.msra.mxu0 0.0
    %1091 = vmatprep.subr.mxu0 0.0
    %1092 = vmatpush1.msra.mxu0 0.0
    %1093 = vmatprep.subr.mxu0 0.0
    %1094 = vmatpush1.msra.mxu0 0.0
    %1095 = vmatprep.subr.mxu0 0.0
    %1096 = vmatpush1.msra.mxu0 0.0
    %1097 = vmatprep.subr.mxu0 0.0
    %1098 = vmatpush1.msra.mxu0 0.0
    %1099 = vmatprep.subr.mxu0 0.0
    %1100 = vmatpush1.msra.mxu0 0.0
    %1101 = vmatprep.subr.mxu0 0.0
    %1102 = vmatpush1.msra.mxu0 0.0
    %1103 = vmatprep.subr.mxu0 0.0
    %1104 = vmatpush1.msra.mxu0 0.0
    %1105 = vmatprep.subr.mxu0 0.0
    %1106 = vmatpush1.msra.mxu0 0.0
    %1107 = vmatprep.subr.mxu0 0.0
    %1108 = vmatpush1.msra.mxu0 0.0
    %1109 = vmatprep.mubr.f32.mxu0 0.0
    %1110 = vmatmul.mubr.f32.gmra.mrb[0].mxu0 %v477
    %v1111 = vpop.f32.mrb[0].mxu0
    %v1112 = vadd.f32 0.0, %v1111
    %v1113 = vpop.f32.mrb[0].mxu0
    %1114 = vmatprep.mubr.f32.mxu0 0.0
    %1115 = vmatmul.mubr.f32.gmra.mrb[0].mxu0 %v480
    %v1116 = vpop.f32.mrb[0].mxu0
    %v1117 = vadd.f32 0.0, %v1116
    %v1118 = vpop.f32.mrb[0].mxu0
    %1119 = vdwg.mxu0
    %s1120 = scalar_lea.vmem [#allocation6], 128
    %v1121 = vld [vmem:[%s1120] sm:$0xff]
    %v1122 = vld [vmem:[%s1120 + $0x8] sm:$0xff]
    %v1123 = vld [vmem:[%s1120 + $0x10] sm:$0xff]
    %v1124 = vld [vmem:[%s1120 + $0x18] sm:$0xff]
    %v1125 = vld [vmem:[%s1120 + $0x20] sm:$0xff]
    %v1126 = vld [vmem:[%s1120 + $0x28] sm:$0xff]
    %v1127 = vld [vmem:[%s1120 + $0x30] sm:$0xff]
    %v1128 = vld [vmem:[%s1120 + $0x38] sm:$0xff]
    %v1129 = vld [vmem:[%s1120 + $0x40] sm:$0xff]
    %v1130 = vld [vmem:[%s1120 + $0x48] sm:$0xff]
    %v1131 = vld [vmem:[%s1120 + $0x50] sm:$0xff]
    %v1132 = vld [vmem:[%s1120 + $0x58] sm:$0xff]
    %v1133 = vld [vmem:[%s1120 + $0x60] sm:$0xff]
    %v1134 = vld [vmem:[%s1120 + $0x68] sm:$0xff]
    %v1135 = vld [vmem:[%s1120 + $0x70] sm:$0xff]
    %v1136 = vld [vmem:[%s1120 + $0x78] sm:$0xff]
    %s1137 = scalar_lea.vmem [#allocation7], 128
    %v1138 = vld [vmem:[%s1137] sm:$0xff]
    %v1139 = vld [vmem:[%s1137 + $0x8] sm:$0xff]
    %v1140 = vld [vmem:[%s1137 + $0x10] sm:$0xff]
    %v1141 = vld [vmem:[%s1137 + $0x18] sm:$0xff]
    %v1142 = vld [vmem:[%s1137 + $0x20] sm:$0xff]
    %v1143 = vld [vmem:[%s1137 + $0x28] sm:$0xff]
    %v1144 = vld [vmem:[%s1137 + $0x30] sm:$0xff]
    %v1145 = vld [vmem:[%s1137 + $0x38] sm:$0xff]
    %v1146 = vld [vmem:[%s1137 + $0x40] sm:$0xff]
    %v1147 = vld [vmem:[%s1137 + $0x48] sm:$0xff]
    %v1148 = vld [vmem:[%s1137 + $0x50] sm:$0xff]
    %v1149 = vld [vmem:[%s1137 + $0x58] sm:$0xff]
    %v1150 = vld [vmem:[%s1137 + $0x60] sm:$0xff]
    %v1151 = vld [vmem:[%s1137 + $0x68] sm:$0xff]
    %v1152 = vld [vmem:[%s1137 + $0x70] sm:$0xff]
    %v1153 = vld [vmem:[%s1137 + $0x78] sm:$0xff]
    %1154 = vmatprep.subr.mxu0 0.0
    %1155 = vmatpush1.msra.mxu0 %v1138
    %1156 = vmatprep.subr.mxu0 0.0
    %1157 = vmatpush1.msra.mxu0 %v1139
    %1158 = vmatprep.subr.mxu0 0.0
    %1159 = vmatpush1.msra.mxu0 %v1140
    %1160 = vmatprep.subr.mxu0 0.0
    %1161 = vmatpush1.msra.mxu0 %v1141
    %1162 = vmatprep.subr.mxu0 0.0
    %1163 = vmatpush1.msra.mxu0 %v1142
    %1164 = vmatprep.subr.mxu0 0.0
    %1165 = vmatpush1.msra.mxu0 %v1143
    %1166 = vmatprep.subr.mxu0 0.0
    %1167 = vmatpush1.msra.mxu0 %v1144
    %1168 = vmatprep.subr.mxu0 0.0
    %1169 = vmatpush1.msra.mxu0 %v1145
    %1170 = vmatprep.subr.mxu0 0.0
    %1171 = vmatpush1.msra.mxu0 %v1146
    %1172 = vmatprep.subr.mxu0 0.0
    %1173 = vmatpush1.msra.mxu0 %v1147
    %1174 = vmatprep.subr.mxu0 0.0
    %1175 = vmatpush1.msra.mxu0 %v1148
    %1176 = vmatprep.subr.mxu0 0.0
    %1177 = vmatpush1.msra.mxu0 %v1149
    %1178 = vmatprep.subr.mxu0 0.0
    %1179 = vmatpush1.msra.mxu0 %v1150
    %1180 = vmatprep.subr.mxu0 0.0
    %1181 = vmatpush1.msra.mxu0 %v1151
    %1182 = vmatprep.subr.mxu0 0.0
    %1183 = vmatpush1.msra.mxu0 %v1152
    %1184 = vmatprep.subr.mxu0 0.0
    %1185 = vmatpush1.msra.mxu0 %v1153
    %1186 = vmatprep.subr.mxu0 0.0
    %1187 = vmatpush1.msra.mxu0 0.0
    %1188 = vmatprep.subr.mxu0 0.0
    %1189 = vmatpush1.msra.mxu0 0.0
    %1190 = vmatprep.subr.mxu0 0.0
    %1191 = vmatpush1.msra.mxu0 0.0
    %1192 = vmatprep.subr.mxu0 0.0
    %1193 = vmatpush1.msra.mxu0 0.0
    %1194 = vmatprep.subr.mxu0 0.0
    %1195 = vmatpush1.msra.mxu0 0.0
    %1196 = vmatprep.subr.mxu0 0.0
    %1197 = vmatpush1.msra.mxu0 0.0
    %1198 = vmatprep.subr.mxu0 0.0
    %1199 = vmatpush1.msra.mxu0 0.0
    %1200 = vmatprep.subr.mxu0 0.0
    %1201 = vmatpush1.msra.mxu0 0.0
    %1202 = vmatprep.subr.mxu0 0.0
    %1203 = vmatpush1.msra.mxu0 0.0
    %1204 = vmatprep.subr.mxu0 0.0
    %1205 = vmatpush1.msra.mxu0 0.0
    %1206 = vmatprep.subr.mxu0 0.0
    %1207 = vmatpush1.msra.mxu0 0.0
    %1208 = vmatprep.subr.mxu0 0.0
    %1209 = vmatpush1.msra.mxu0 0.0
    %1210 = vmatprep.subr.mxu0 0.0
    %1211 = vmatpush1.msra.mxu0 0.0
    %1212 = vmatprep.subr.mxu0 0.0
    %1213 = vmatpush1.msra.mxu0 0.0
    %1214 = vmatprep.subr.mxu0 0.0
    %1215 = vmatpush1.msra.mxu0 0.0
    %1216 = vmatprep.subr.mxu0 0.0
    %1217 = vmatpush1.msra.mxu0 0.0
    %1218 = vmatprep.mubr.f32.mxu0 0.0
    %1219 = vmatmul.mubr.f32.gmra.mrb[0].mxu0 %v1112
    %v1220 = vpop.f32.mrb[0].mxu0
    %v1221 = vadd.f32 0.0, %v1220
    %v1222 = vpop.f32.mrb[0].mxu0
    %1223 = vmatprep.mubr.f32.mxu0 0.0
    %1224 = vmatmul.mubr.f32.gmra.mrb[0].mxu0 %v1117
    %v1225 = vpop.f32.mrb[0].mxu0
    %v1226 = vadd.f32 0.0, %v1225
    %v1227 = vpop.f32.mrb[0].mxu0
    %1228 = vdwg.mxu0
    %1229 = vmatprep.subr.mxu0 0.0
    %1230 = vmatpush1.msra.mxu0 %v1121
    %1231 = vmatprep.subr.mxu0 0.0
    %1232 = vmatpush1.msra.mxu0 %v1122
    %1233 = vmatprep.subr.mxu0 0.0
    %1234 = vmatpush1.msra.mxu0 %v1123
    %1235 = vmatprep.subr.mxu0 0.0
    %1236 = vmatpush1.msra.mxu0 %v1124
    %1237 = vmatprep.subr.mxu0 0.0
    %1238 = vmatpush1.msra.mxu0 %v1125
    %1239 = vmatprep.subr.mxu0 0.0
    %1240 = vmatpush1.msra.mxu0 %v1126
    %1241 = vmatprep.subr.mxu0 0.0
    %1242 = vmatpush1.msra.mxu0 %v1127
    %1243 = vmatprep.subr.mxu0 0.0
    %1244 = vmatpush1.msra.mxu0 %v1128
    %1245 = vmatprep.subr.mxu0 0.0
    %1246 = vmatpush1.msra.mxu0 %v1129
    %1247 = vmatprep.subr.mxu0 0.0
    %1248 = vmatpush1.msra.mxu0 %v1130
    %1249 = vmatprep.subr.mxu0 0.0
    %1250 = vmatpush1.msra.mxu0 %v1131
    %1251 = vmatprep.subr.mxu0 0.0
    %1252 = vmatpush1.msra.mxu0 %v1132
    %1253 = vmatprep.subr.mxu0 0.0
    %1254 = vmatpush1.msra.mxu0 %v1133
    %1255 = vmatprep.subr.mxu0 0.0
    %1256 = vmatpush1.msra.mxu0 %v1134
    %1257 = vmatprep.subr.mxu0 0.0
    %1258 = vmatpush1.msra.mxu0 %v1135
    %1259 = vmatprep.subr.mxu0 0.0
    %1260 = vmatpush1.msra.mxu0 %v1136
    %1261 = vmatprep.subr.mxu0 0.0
    %1262 = vmatpush1.msra.mxu0 0.0
    %1263 = vmatprep.subr.mxu0 0.0
    %1264 = vmatpush1.msra.mxu0 0.0
    %1265 = vmatprep.subr.mxu0 0.0
    %1266 = vmatpush1.msra.mxu0 0.0
    %1267 = vmatprep.subr.mxu0 0.0
    %1268 = vmatpush1.msra.mxu0 0.0
    %1269 = vmatprep.subr.mxu0 0.0
    %1270 = vmatpush1.msra.mxu0 0.0
    %1271 = vmatprep.subr.mxu0 0.0
    %1272 = vmatpush1.msra.mxu0 0.0
    %1273 = vmatprep.subr.mxu0 0.0
    %1274 = vmatpush1.msra.mxu0 0.0
    %1275 = vmatprep.subr.mxu0 0.0
    %1276 = vmatpush1.msra.mxu0 0.0
    %1277 = vmatprep.subr.mxu0 0.0
    %1278 = vmatpush1.msra.mxu0 0.0
    %1279 = vmatprep.subr.mxu0 0.0
    %1280 = vmatpush1.msra.mxu0 0.0
    %1281 = vmatprep.subr.mxu0 0.0
    %1282 = vmatpush1.msra.mxu0 0.0
    %1283 = vmatprep.subr.mxu0 0.0
    %1284 = vmatpush1.msra.mxu0 0.0
    %1285 = vmatprep.subr.mxu0 0.0
    %1286 = vmatpush1.msra.mxu0 0.0
    %1287 = vmatprep.subr.mxu0 0.0
    %1288 = vmatpush1.msra.mxu0 0.0
    %1289 = vmatprep.subr.mxu0 0.0
    %1290 = vmatpush1.msra.mxu0 0.0
    %1291 = vmatprep.subr.mxu0 0.0
    %1292 = vmatpush1.msra.mxu0 0.0
    %1293 = vmatprep.mubr.f32.mxu0 0.0
    %1294 = vmatmul.mubr.f32.gmra.mrb[0].mxu0 %v748
    %v1295 = vpop.f32.mrb[0].mxu0
    %v1296 = vadd.f32 %v1221, %v1295
    %v1297 = vpop.f32.mrb[0].mxu0
    %1298 = vmatprep.mubr.f32.mxu0 0.0
    %1299 = vmatmul.mubr.f32.gmra.mrb[0].mxu0 %v749
    %v1300 = vpop.f32.mrb[0].mxu0
    %v1301 = vadd.f32 %v1226, %v1300
    %v1302 = vpop.f32.mrb[0].mxu0
    %1303 = vdwg.mxu0
    %s1304 = scalar_lea.vmem %s10, 1
    %v1305 = vld [vmem:[%s1304] sm:$0x1]
    %v1307 = vlaneseq
    %v1308 = vshrl.u32 %v1307, 7
    %v1309 = vsub.s32 0, %v1308
    %v1310 = vrot.slane %v1305, %v1309
    %v1312 = vadd.f32 %v1296, %v1310
    %v1313 = vadd.f32 %v1301, %v1310
    %v1314 = vmax.f32 %v1312, 0.0
    %v1315 = vmax.f32 %v1313, 0.0
    %s1316 = scalar_lea.vmem [#allocation2], 256
    %v1317 = vld [vmem:[%s1316] sm:$0xff]
    %v1318 = vld [vmem:[%s1316 + $0x8] sm:$0xff]
    %v1319 = vld [vmem:[%s1316 + $0x10] sm:$0xff]
    %v1320 = vld [vmem:[%s1316 + $0x18] sm:$0xff]
    %v1321 = vld [vmem:[%s1316 + $0x20] sm:$0xff]
    %v1322 = vld [vmem:[%s1316 + $0x28] sm:$0xff]
    %v1323 = vld [vmem:[%s1316 + $0x30] sm:$0xff]
    %v1324 = vld [vmem:[%s1316 + $0x38] sm:$0xff]
    %v1325 = vld [vmem:[%s1316 + $0x40] sm:$0xff]
    %v1326 = vld [vmem:[%s1316 + $0x48] sm:$0xff]
    %v1327 = vld [vmem:[%s1316 + $0x50] sm:$0xff]
    %v1328 = vld [vmem:[%s1316 + $0x58] sm:$0xff]
    %v1329 = vld [vmem:[%s1316 + $0x60] sm:$0xff]
    %v1330 = vld [vmem:[%s1316 + $0x68] sm:$0xff]
    %v1331 = vld [vmem:[%s1316 + $0x70] sm:$0xff]
    %v1332 = vld [vmem:[%s1316 + $0x78] sm:$0xff]
    %1333 = vmatprep.subr.mxu0 0.0
    %1334 = vmatpush1.msra.mxu0 %v1317
    %1335 = vmatprep.subr.mxu0 0.0
    %1336 = vmatpush1.msra.mxu0 %v1318
    %1337 = vmatprep.subr.mxu0 0.0
    %1338 = vmatpush1.msra.mxu0 %v1319
    %1339 = vmatprep.subr.mxu0 0.0
    %1340 = vmatpush1.msra.mxu0 %v1320
    %1341 = vmatprep.subr.mxu0 0.0
    %1342 = vmatpush1.msra.mxu0 %v1321
    %1343 = vmatprep.subr.mxu0 0.0
    %1344 = vmatpush1.msra.mxu0 %v1322
    %1345 = vmatprep.subr.mxu0 0.0
    %1346 = vmatpush1.msra.mxu0 %v1323
    %1347 = vmatprep.subr.mxu0 0.0
    %1348 = vmatpush1.msra.mxu0 %v1324
    %1349 = vmatprep.subr.mxu0 0.0
    %1350 = vmatpush1.msra.mxu0 %v1325
    %1351 = vmatprep.subr.mxu0 0.0
    %1352 = vmatpush1.msra.mxu0 %v1326
    %1353 = vmatprep.subr.mxu0 0.0
    %1354 = vmatpush1.msra.mxu0 %v1327
    %1355 = vmatprep.subr.mxu0 0.0
    %1356 = vmatpush1.msra.mxu0 %v1328
    %1357 = vmatprep.subr.mxu0 0.0
    %1358 = vmatpush1.msra.mxu0 %v1329
    %1359 = vmatprep.subr.mxu0 0.0
    %1360 = vmatpush1.msra.mxu0 %v1330
    %1361 = vmatprep.subr.mxu0 0.0
    %1362 = vmatpush1.msra.mxu0 %v1331
    %1363 = vmatprep.subr.mxu0 0.0
    %1364 = vmatpush1.msra.mxu0 %v1332
    %1365 = vmatprep.subr.mxu0 0.0
    %1366 = vmatpush1.msra.mxu0 0.0
    %1367 = vmatprep.subr.mxu0 0.0
    %1368 = vmatpush1.msra.mxu0 0.0
    %1369 = vmatprep.subr.mxu0 0.0
    %1370 = vmatpush1.msra.mxu0 0.0
    %1371 = vmatprep.subr.mxu0 0.0
    %1372 = vmatpush1.msra.mxu0 0.0
    %1373 = vmatprep.subr.mxu0 0.0
    %1374 = vmatpush1.msra.mxu0 0.0
    %1375 = vmatprep.subr.mxu0 0.0
    %1376 = vmatpush1.msra.mxu0 0.0
    %1377 = vmatprep.subr.mxu0 0.0
    %1378 = vmatpush1.msra.mxu0 0.0
    %1379 = vmatprep.subr.mxu0 0.0
    %1380 = vmatpush1.msra.mxu0 0.0
    %1381 = vmatprep.subr.mxu0 0.0
    %1382 = vmatpush1.msra.mxu0 0.0
    %1383 = vmatprep.subr.mxu0 0.0
    %1384 = vmatpush1.msra.mxu0 0.0
    %1385 = vmatprep.subr.mxu0 0.0
    %1386 = vmatpush1.msra.mxu0 0.0
    %1387 = vmatprep.subr.mxu0 0.0
    %1388 = vmatpush1.msra.mxu0 0.0
    %1389 = vmatprep.subr.mxu0 0.0
    %1390 = vmatpush1.msra.mxu0 0.0
    %1391 = vmatprep.subr.mxu0 0.0
    %1392 = vmatpush1.msra.mxu0 0.0
    %1393 = vmatprep.subr.mxu0 0.0
    %1394 = vmatpush1.msra.mxu0 0.0
    %1395 = vmatprep.subr.mxu0 0.0
    %1396 = vmatpush1.msra.mxu0 0.0
    %1397 = vmatprep.mubr.f32.mxu0 0.0
    %1398 = vmatmul.mubr.f32.gmra.mrb[0].mxu0 %v1314
    %v1399 = vpop.f32.mrb[0].mxu0
    %v1400 = vadd.f32 0.0, %v1399
    %v1401 = vpop.f32.mrb[0].mxu0
    %1402 = vmatprep.mubr.f32.mxu0 0.0
    %1403 = vmatmul.mubr.f32.gmra.mrb[0].mxu0 %v1315
    %v1404 = vpop.f32.mrb[0].mxu0
    %v1405 = vadd.f32 0.0, %v1404
    %v1406 = vpop.f32.mrb[0].mxu0
    %1407 = vdwg.mxu0
    %s1408 = scalar_lea.vmem [#allocation4], 256
    %v1409 = vld [vmem:[%s1408] sm:$0xff]
    %v1410 = vld [vmem:[%s1408 + $0x8] sm:$0xff]
    %v1411 = vld [vmem:[%s1408 + $0x10] sm:$0xff]
    %v1412 = vld [vmem:[%s1408 + $0x18] sm:$0xff]
    %v1413 = vld [vmem:[%s1408 + $0x20] sm:$0xff]
    %v1414 = vld [vmem:[%s1408 + $0x28] sm:$0xff]
    %v1415 = vld [vmem:[%s1408 + $0x30] sm:$0xff]
    %v1416 = vld [vmem:[%s1408 + $0x38] sm:$0xff]
    %v1417 = vld [vmem:[%s1408 + $0x40] sm:$0xff]
    %v1418 = vld [vmem:[%s1408 + $0x48] sm:$0xff]
    %v1419 = vld [vmem:[%s1408 + $0x50] sm:$0xff]
    %v1420 = vld [vmem:[%s1408 + $0x58] sm:$0xff]
    %v1421 = vld [vmem:[%s1408 + $0x60] sm:$0xff]
    %v1422 = vld [vmem:[%s1408 + $0x68] sm:$0xff]
    %v1423 = vld [vmem:[%s1408 + $0x70] sm:$0xff]
    %v1424 = vld [vmem:[%s1408 + $0x78] sm:$0xff]
    %1425 = vmatprep.subr.mxu0 0.0
    %1426 = vmatpush1.msra.mxu0 %v1409
    %1427 = vmatprep.subr.mxu0 0.0
    %1428 = vmatpush1.msra.mxu0 %v1410
    %1429 = vmatprep.subr.mxu0 0.0
    %1430 = vmatpush1.msra.mxu0 %v1411
    %1431 = vmatprep.subr.mxu0 0.0
    %1432 = vmatpush1.msra.mxu0 %v1412
    %1433 = vmatprep.subr.mxu0 0.0
    %1434 = vmatpush1.msra.mxu0 %v1413
    %1435 = vmatprep.subr.mxu0 0.0
    %1436 = vmatpush1.msra.mxu0 %v1414
    %1437 = vmatprep.subr.mxu0 0.0
    %1438 = vmatpush1.msra.mxu0 %v1415
    %1439 = vmatprep.subr.mxu0 0.0
    %1440 = vmatpush1.msra.mxu0 %v1416
    %1441 = vmatprep.subr.mxu0 0.0
    %1442 = vmatpush1.msra.mxu0 %v1417
    %1443 = vmatprep.subr.mxu0 0.0
    %1444 = vmatpush1.msra.mxu0 %v1418
    %1445 = vmatprep.subr.mxu0 0.0
    %1446 = vmatpush1.msra.mxu0 %v1419
    %1447 = vmatprep.subr.mxu0 0.0
    %1448 = vmatpush1.msra.mxu0 %v1420
    %1449 = vmatprep.subr.mxu0 0.0
    %1450 = vmatpush1.msra.mxu0 %v1421
    %1451 = vmatprep.subr.mxu0 0.0
    %1452 = vmatpush1.msra.mxu0 %v1422
    %1453 = vmatprep.subr.mxu0 0.0
    %1454 = vmatpush1.msra.mxu0 %v1423
    %1455 = vmatprep.subr.mxu0 0.0
    %1456 = vmatpush1.msra.mxu0 %v1424
    %1457 = vmatprep.subr.mxu0 0.0
    %1458 = vmatpush1.msra.mxu0 0.0
    %1459 = vmatprep.subr.mxu0 0.0
    %1460 = vmatpush1.msra.mxu0 0.0
    %1461 = vmatprep.subr.mxu0 0.0
    %1462 = vmatpush1.msra.mxu0 0.0
    %1463 = vmatprep.subr.mxu0 0.0
    %1464 = vmatpush1.msra.mxu0 0.0
    %1465 = vmatprep.subr.mxu0 0.0
    %1466 = vmatpush1.msra.mxu0 0.0
    %1467 = vmatprep.subr.mxu0 0.0
    %1468 = vmatpush1.msra.mxu0 0.0
    %1469 = vmatprep.subr.mxu0 0.0
    %1470 = vmatpush1.msra.mxu0 0.0
    %1471 = vmatprep.subr.mxu0 0.0
    %1472 = vmatpush1.msra.mxu0 0.0
    %1473 = vmatprep.subr.mxu0 0.0
    %1474 = vmatpush1.msra.mxu0 0.0
    %1475 = vmatprep.subr.mxu0 0.0
    %1476 = vmatpush1.msra.mxu0 0.0
    %1477 = vmatprep.subr.mxu0 0.0
    %1478 = vmatpush1.msra.mxu0 0.0
    %1479 = vmatprep.subr.mxu0 0.0
    %1480 = vmatpush1.msra.mxu0 0.0
    %1481 = vmatprep.subr.mxu0 0.0
    %1482 = vmatpush1.msra.mxu0 0.0
    %1483 = vmatprep.subr.mxu0 0.0
    %1484 = vmatpush1.msra.mxu0 0.0
    %1485 = vmatprep.subr.mxu0 0.0
    %1486 = vmatpush1.msra.mxu0 0.0
    %1487 = vmatprep.subr.mxu0 0.0
    %1488 = vmatpush1.msra.mxu0 0.0
    %1489 = vmatprep.mubr.f32.mxu0 0.0
    %1490 = vmatmul.mubr.f32.gmra.mrb[0].mxu0 %v164
    %v1491 = vpop.f32.mrb[0].mxu0
    %v1492 = vadd.f32 0.0, %v1491
    %v1493 = vpop.f32.mrb[0].mxu0
    %1494 = vmatprep.mubr.f32.mxu0 0.0
    %1495 = vmatmul.mubr.f32.gmra.mrb[0].mxu0 %v165
    %v1496 = vpop.f32.mrb[0].mxu0
    %v1497 = vadd.f32 0.0, %v1496
    %v1498 = vpop.f32.mrb[0].mxu0
    %1499 = vmatprep.mubr.f32.mxu0 0.0
    %1500 = vmatmul.mubr.f32.gmra.mrb[0].mxu0 %v166
    %v1501 = vpop.f32.mrb[0].mxu0
    %v1502 = vadd.f32 0.0, %v1501
    %v1503 = vpop.f32.mrb[0].mxu0
    %1504 = vmatprep.mubr.f32.mxu0 0.0
    %1505 = vmatmul.mubr.f32.gmra.mrb[0].mxu0 %v167
    %v1506 = vpop.f32.mrb[0].mxu0
    %v1507 = vadd.f32 0.0, %v1506
    %v1508 = vpop.f32.mrb[0].mxu0
    %1509 = vdwg.mxu0
    %1510 = vmatprep.subr.mxu0 0.0
    %1511 = vmatpush1.msra.mxu0 %v1400
    %1512 = vmatprep.subr.mxu0 0.0
    %1513 = vmatpush1.msra.mxu0 %v1405
    %1514 = vmatprep.subr.mxu0 0.0
    %1515 = vmatpush1.msra.mxu0 0.0
    %1516 = vmatprep.subr.mxu0 0.0
    %1517 = vmatpush1.msra.mxu0 0.0
    %1518 = vmatprep.subr.mxu0 0.0
    %1519 = vmatpush1.msra.mxu0 0.0
    %1520 = vmatprep.subr.mxu0 0.0
    %1521 = vmatpush1.msra.mxu0 0.0
    %1522 = vmatprep.subr.mxu0 0.0
    %1523 = vmatpush1.msra.mxu0 0.0
    %1524 = vmatprep.subr.mxu0 0.0
    %1525 = vmatpush1.msra.mxu0 0.0
    %1526 = vmatprep.subr.mxu0 0.0
    %1527 = vmatpush1.msra.mxu0 0.0
    %1528 = vmatprep.subr.mxu0 0.0
    %1529 = vmatpush1.msra.mxu0 0.0
    %1530 = vmatprep.subr.mxu0 0.0
    %1531 = vmatpush1.msra.mxu0 0.0
    %1532 = vmatprep.subr.mxu0 0.0
    %1533 = vmatpush1.msra.mxu0 0.0
    %1534 = vmatprep.subr.mxu0 0.0
    %1535 = vmatpush1.msra.mxu0 0.0
    %1536 = vmatprep.subr.mxu0 0.0
    %1537 = vmatpush1.msra.mxu0 0.0
    %1538 = vmatprep.subr.mxu0 0.0
    %1539 = vmatpush1.msra.mxu0 0.0
    %1540 = vmatprep.subr.mxu0 0.0
    %1541 = vmatpush1.msra.mxu0 0.0
    %1542 = vmatprep.subr.mxu0 0.0
    %1543 = vmatpush1.msra.mxu0 0.0
    %1544 = vmatprep.subr.mxu0 0.0
    %1545 = vmatpush1.msra.mxu0 0.0
    %1546 = vmatprep.subr.mxu0 0.0
    %1547 = vmatpush1.msra.mxu0 0.0
    %1548 = vmatprep.subr.mxu0 0.0
    %1549 = vmatpush1.msra.mxu0 0.0
    %1550 = vmatprep.subr.mxu0 0.0
    %1551 = vmatpush1.msra.mxu0 0.0
    %1552 = vmatprep.subr.mxu0 0.0
    %1553 = vmatpush1.msra.mxu0 0.0
    %1554 = vmatprep.subr.mxu0 0.0
    %1555 = vmatpush1.msra.mxu0 0.0
    %1556 = vmatprep.subr.mxu0 0.0
    %1557 = vmatpush1.msra.mxu0 0.0
    %1558 = vmatprep.subr.mxu0 0.0
    %1559 = vmatpush1.msra.mxu0 0.0
    %1560 = vmatprep.subr.mxu0 0.0
    %1561 = vmatpush1.msra.mxu0 0.0
    %1562 = vmatprep.subr.mxu0 0.0
    %1563 = vmatpush1.msra.mxu0 0.0
    %1564 = vmatprep.subr.mxu0 0.0
    %1565 = vmatpush1.msra.mxu0 0.0
    %1566 = vmatprep.subr.mxu0 0.0
    %1567 = vmatpush1.msra.mxu0 0.0
    %1568 = vmatprep.subr.mxu0 0.0
    %1569 = vmatpush1.msra.mxu0 0.0
    %1570 = vmatprep.subr.mxu0 0.0
    %1571 = vmatpush1.msra.mxu0 0.0
    %1572 = vmatprep.subr.mxu0 0.0
    %1573 = vmatpush1.msra.mxu0 0.0
    %1574 = vmatprep.mubr.f32.mxu0 0.0
    %1575 = vmatmul.mubr.f32.gmra.mrb[0].mxu0 %v364
    %v1576 = vpop.f32.mrb[0].mxu0
    %v1577 = vadd.f32 %v1492, %v1576
    %v1578 = vpop.f32.mrb[0].mxu0
    %1579 = vmatprep.mubr.f32.mxu0 0.0
    %1580 = vmatmul.mubr.f32.gmra.mrb[0].mxu0 %v367
    %v1581 = vpop.f32.mrb[0].mxu0
    %v1582 = vadd.f32 %v1497, %v1581
    %v1583 = vpop.f32.mrb[0].mxu0
    %1584 = vmatprep.mubr.f32.mxu0 0.0
    %1585 = vmatmul.mubr.f32.gmra.mrb[0].mxu0 %v370
    %v1586 = vpop.f32.mrb[0].mxu0
    %v1587 = vadd.f32 %v1502, %v1586
    %v1588 = vpop.f32.mrb[0].mxu0
    %1589 = vmatprep.mubr.f32.mxu0 0.0
    %1590 = vmatmul.mubr.f32.gmra.mrb[0].mxu0 %v373
    %v1591 = vpop.f32.mrb[0].mxu0
    %v1592 = vadd.f32 %v1507, %v1591
    %v1593 = vpop.f32.mrb[0].mxu0
    %1594 = vdwg.mxu0
    %s1595 = scalar_lea.vmem %s7, 2
    %v1596 = vld [vmem:[%s1595] sm:$0x1]
    %v1598 = vlaneseq
    %v1599 = vshrl.u32 %v1598, 7
    %v1600 = vsub.s32 0, %v1599
    %v1601 = vrot.slane %v1596, %v1600
    %v1603 = vadd.f32 %v1577, %v1601
    %v1604 = vadd.f32 %v1582, %v1601
    %v1605 = vadd.f32 %v1587, %v1601
    %v1606 = vadd.f32 %v1592, %v1601
    %v1607 = vmax.f32 %v1603, 0.0
    %v1608 = vmax.f32 %v1604, 0.0
    %v1609 = vmax.f32 %v1605, 0.0
    %v1610 = vmax.f32 %v1606, 0.0
    %1611 = vmatprep.subr.mxu0 0.0
    %1612 = vmatpush1.msra.mxu0 %v1607
    %1613 = vmatprep.subr.mxu0 0.0
    %1614 = vmatpush1.msra.mxu0 %v1608
    %1615 = vmatprep.subr.mxu0 0.0
    %1616 = vmatpush1.msra.mxu0 %v1609
    %1617 = vmatprep.subr.mxu0 0.0
    %1618 = vmatpush1.msra.mxu0 %v1610
    %1619 = vmatprep.subr.mxu0 0.0
    %1620 = vmatpush1.msra.mxu0 0.0
    %1621 = vmatprep.subr.mxu0 0.0
    %1622 = vmatpush1.msra.mxu0 0.0
    %1623 = vmatprep.subr.mxu0 0.0
    %1624 = vmatpush1.msra.mxu0 0.0
    %1625 = vmatprep.subr.mxu0 0.0
    %1626 = vmatpush1.msra.mxu0 0.0
    %1627 = vmatprep.subr.mxu0 0.0
    %1628 = vmatpush1.msra.mxu0 0.0
    %1629 = vmatprep.subr.mxu0 0.0
    %1630 = vmatpush1.msra.mxu0 0.0
    %1631 = vmatprep.subr.mxu0 0.0
    %1632 = vmatpush1.msra.mxu0 0.0
    %1633 = vmatprep.subr.mxu0 0.0
    %1634 = vmatpush1.msra.mxu0 0.0
    %1635 = vmatprep.subr.mxu0 0.0
    %1636 = vmatpush1.msra.mxu0 0.0
    %1637 = vmatprep.subr.mxu0 0.0
    %1638 = vmatpush1.msra.mxu0 0.0
    %1639 = vmatprep.subr.mxu0 0.0
    %1640 = vmatpush1.msra.mxu0 0.0
    %1641 = vmatprep.subr.mxu0 0.0
    %1642 = vmatpush1.msra.mxu0 0.0
    %1643 = vmatprep.subr.mxu0 0.0
    %1644 = vmatpush1.msra.mxu0 0.0
    %1645 = vmatprep.subr.mxu0 0.0
    %1646 = vmatpush1.msra.mxu0 0.0
    %1647 = vmatprep.subr.mxu0 0.0
    %1648 = vmatpush1.msra.mxu0 0.0
    %1649 = vmatprep.subr.mxu0 0.0
    %1650 = vmatpush1.msra.mxu0 0.0
    %1651 = vmatprep.subr.mxu0 0.0
    %1652 = vmatpush1.msra.mxu0 0.0
    %1653 = vmatprep.subr.mxu0 0.0
    %1654 = vmatpush1.msra.mxu0 0.0
    %1655 = vmatprep.subr.mxu0 0.0
    %1656 = vmatpush1.msra.mxu0 0.0
    %1657 = vmatprep.subr.mxu0 0.0
    %1658 = vmatpush1.msra.mxu0 0.0
    %1659 = vmatprep.subr.mxu0 0.0
    %1660 = vmatpush1.msra.mxu0 0.0
    %1661 = vmatprep.subr.mxu0 0.0
    %1662 = vmatpush1.msra.mxu0 0.0
    %1663 = vmatprep.subr.mxu0 0.0
    %1664 = vmatpush1.msra.mxu0 0.0
    %1665 = vmatprep.subr.mxu0 0.0
    %1666 = vmatpush1.msra.mxu0 0.0
    %1667 = vmatprep.subr.mxu0 0.0
    %1668 = vmatpush1.msra.mxu0 0.0
    %1669 = vmatprep.subr.mxu0 0.0
    %1670 = vmatpush1.msra.mxu0 0.0
    %1671 = vmatprep.subr.mxu0 0.0
    %1672 = vmatpush1.msra.mxu0 0.0
    %1673 = vmatprep.subr.mxu0 0.0
    %1674 = vmatpush1.msra.mxu0 0.0
    %1675 = vmatprep.mubr.f32.mxu0 0.0
    %1676 = vmatmul.mubr.f32.gmra.mrb[0].mxu0 %v477
    %v1677 = vpop.f32.mrb[0].mxu0
    %v1678 = vadd.f32 0.0, %v1677
    %v1679 = vpop.f32.mrb[0].mxu0
    %1680 = vmatprep.mubr.f32.mxu0 0.0
    %1681 = vmatmul.mubr.f32.gmra.mrb[0].mxu0 %v480
    %v1682 = vpop.f32.mrb[0].mxu0
    %v1683 = vadd.f32 0.0, %v1682
    %v1684 = vpop.f32.mrb[0].mxu0
    %1685 = vdwg.mxu0
    %s1686 = scalar_lea.vmem [#allocation6], 256
    %v1687 = vld [vmem:[%s1686] sm:$0xff]
    %v1688 = vld [vmem:[%s1686 + $0x8] sm:$0xff]
    %v1689 = vld [vmem:[%s1686 + $0x10] sm:$0xff]
    %v1690 = vld [vmem:[%s1686 + $0x18] sm:$0xff]
    %v1691 = vld [vmem:[%s1686 + $0x20] sm:$0xff]
    %v1692 = vld [vmem:[%s1686 + $0x28] sm:$0xff]
    %v1693 = vld [vmem:[%s1686 + $0x30] sm:$0xff]
    %v1694 = vld [vmem:[%s1686 + $0x38] sm:$0xff]
    %v1695 = vld [vmem:[%s1686 + $0x40] sm:$0xff]
    %v1696 = vld [vmem:[%s1686 + $0x48] sm:$0xff]
    %v1697 = vld [vmem:[%s1686 + $0x50] sm:$0xff]
    %v1698 = vld [vmem:[%s1686 + $0x58] sm:$0xff]
    %v1699 = vld [vmem:[%s1686 + $0x60] sm:$0xff]
    %v1700 = vld [vmem:[%s1686 + $0x68] sm:$0xff]
    %v1701 = vld [vmem:[%s1686 + $0x70] sm:$0xff]
    %v1702 = vld [vmem:[%s1686 + $0x78] sm:$0xff]
    %s1703 = scalar_lea.vmem [#allocation7], 256
    %v1704 = vld [vmem:[%s1703] sm:$0xff]
    %v1705 = vld [vmem:[%s1703 + $0x8] sm:$0xff]
    %v1706 = vld [vmem:[%s1703 + $0x10] sm:$0xff]
    %v1707 = vld [vmem:[%s1703 + $0x18] sm:$0xff]
    %v1708 = vld [vmem:[%s1703 + $0x20] sm:$0xff]
    %v1709 = vld [vmem:[%s1703 + $0x28] sm:$0xff]
    %v1710 = vld [vmem:[%s1703 + $0x30] sm:$0xff]
    %v1711 = vld [vmem:[%s1703 + $0x38] sm:$0xff]
    %v1712 = vld [vmem:[%s1703 + $0x40] sm:$0xff]
    %v1713 = vld [vmem:[%s1703 + $0x48] sm:$0xff]
    %v1714 = vld [vmem:[%s1703 + $0x50] sm:$0xff]
    %v1715 = vld [vmem:[%s1703 + $0x58] sm:$0xff]
    %v1716 = vld [vmem:[%s1703 + $0x60] sm:$0xff]
    %v1717 = vld [vmem:[%s1703 + $0x68] sm:$0xff]
    %v1718 = vld [vmem:[%s1703 + $0x70] sm:$0xff]
    %v1719 = vld [vmem:[%s1703 + $0x78] sm:$0xff]
    %1720 = vmatprep.subr.mxu0 0.0
    %1721 = vmatpush1.msra.mxu0 %v1704
    %1722 = vmatprep.subr.mxu0 0.0
    %1723 = vmatpush1.msra.mxu0 %v1705
    %1724 = vmatprep.subr.mxu0 0.0
    %1725 = vmatpush1.msra.mxu0 %v1706
    %1726 = vmatprep.subr.mxu0 0.0
    %1727 = vmatpush1.msra.mxu0 %v1707
    %1728 = vmatprep.subr.mxu0 0.0
    %1729 = vmatpush1.msra.mxu0 %v1708
    %1730 = vmatprep.subr.mxu0 0.0
    %1731 = vmatpush1.msra.mxu0 %v1709
    %1732 = vmatprep.subr.mxu0 0.0
    %1733 = vmatpush1.msra.mxu0 %v1710
    %1734 = vmatprep.subr.mxu0 0.0
    %1735 = vmatpush1.msra.mxu0 %v1711
    %1736 = vmatprep.subr.mxu0 0.0
    %1737 = vmatpush1.msra.mxu0 %v1712
    %1738 = vmatprep.subr.mxu0 0.0
    %1739 = vmatpush1.msra.mxu0 %v1713
    %1740 = vmatprep.subr.mxu0 0.0
    %1741 = vmatpush1.msra.mxu0 %v1714
    %1742 = vmatprep.subr.mxu0 0.0
    %1743 = vmatpush1.msra.mxu0 %v1715
    %1744 = vmatprep.subr.mxu0 0.0
    %1745 = vmatpush1.msra.mxu0 %v1716
    %1746 = vmatprep.subr.mxu0 0.0
    %1747 = vmatpush1.msra.mxu0 %v1717
    %1748 = vmatprep.subr.mxu0 0.0
    %1749 = vmatpush1.msra.mxu0 %v1718
    %1750 = vmatprep.subr.mxu0 0.0
    %1751 = vmatpush1.msra.mxu0 %v1719
    %1752 = vmatprep.subr.mxu0 0.0
    %1753 = vmatpush1.msra.mxu0 0.0
    %1754 = vmatprep.subr.mxu0 0.0
    %1755 = vmatpush1.msra.mxu0 0.0
    %1756 = vmatprep.subr.mxu0 0.0
    %1757 = vmatpush1.msra.mxu0 0.0
    %1758 = vmatprep.subr.mxu0 0.0
    %1759 = vmatpush1.msra.mxu0 0.0
    %1760 = vmatprep.subr.mxu0 0.0
    %1761 = vmatpush1.msra.mxu0 0.0
    %1762 = vmatprep.subr.mxu0 0.0
    %1763 = vmatpush1.msra.mxu0 0.0
    %1764 = vmatprep.subr.mxu0 0.0
    %1765 = vmatpush1.msra.mxu0 0.0
    %1766 = vmatprep.subr.mxu0 0.0
    %1767 = vmatpush1.msra.mxu0 0.0
    %1768 = vmatprep.subr.mxu0 0.0
    %1769 = vmatpush1.msra.mxu0 0.0
    %1770 = vmatprep.subr.mxu0 0.0
    %1771 = vmatpush1.msra.mxu0 0.0
    %1772 = vmatprep.subr.mxu0 0.0
    %1773 = vmatpush1.msra.mxu0 0.0
    %1774 = vmatprep.subr.mxu0 0.0
    %1775 = vmatpush1.msra.mxu0 0.0
    %1776 = vmatprep.subr.mxu0 0.0
    %1777 = vmatpush1.msra.mxu0 0.0
    %1778 = vmatprep.subr.mxu0 0.0
    %1779 = vmatpush1.msra.mxu0 0.0
    %1780 = vmatprep.subr.mxu0 0.0
    %1781 = vmatpush1.msra.mxu0 0.0
    %1782 = vmatprep.subr.mxu0 0.0
    %1783 = vmatpush1.msra.mxu0 0.0
    %1784 = vmatprep.mubr.f32.mxu0 0.0
    %1785 = vmatmul.mubr.f32.gmra.mrb[0].mxu0 %v1678
    %v1786 = vpop.f32.mrb[0].mxu0
    %v1787 = vadd.f32 0.0, %v1786
    %v1788 = vpop.f32.mrb[0].mxu0
    %1789 = vmatprep.mubr.f32.mxu0 0.0
    %1790 = vmatmul.mubr.f32.gmra.mrb[0].mxu0 %v1683
    %v1791 = vpop.f32.mrb[0].mxu0
    %v1792 = vadd.f32 0.0, %v1791
    %v1793 = vpop.f32.mrb[0].mxu0
    %1794 = vdwg.mxu0
    %1795 = vmatprep.subr.mxu0 0.0
    %1796 = vmatpush1.msra.mxu0 %v1687
    %1797 = vmatprep.subr.mxu0 0.0
    %1798 = vmatpush1.msra.mxu0 %v1688
    %1799 = vmatprep.subr.mxu0 0.0
    %1800 = vmatpush1.msra.mxu0 %v1689
    %1801 = vmatprep.subr.mxu0 0.0
    %1802 = vmatpush1.msra.mxu0 %v1690
    %1803 = vmatprep.subr.mxu0 0.0
    %1804 = vmatpush1.msra.mxu0 %v1691
    %1805 = vmatprep.subr.mxu0 0.0
    %1806 = vmatpush1.msra.mxu0 %v1692
    %1807 = vmatprep.subr.mxu0 0.0
    %1808 = vmatpush1.msra.mxu0 %v1693
    %1809 = vmatprep.subr.mxu0 0.0
    %1810 = vmatpush1.msra.mxu0 %v1694
    %1811 = vmatprep.subr.mxu0 0.0
    %1812 = vmatpush1.msra.mxu0 %v1695
    %1813 = vmatprep.subr.mxu0 0.0
    %1814 = vmatpush1.msra.mxu0 %v1696
    %1815 = vmatprep.subr.mxu0 0.0
    %1816 = vmatpush1.msra.mxu0 %v1697
    %1817 = vmatprep.subr.mxu0 0.0
    %1818 = vmatpush1.msra.mxu0 %v1698
    %1819 = vmatprep.subr.mxu0 0.0
    %1820 = vmatpush1.msra.mxu0 %v1699
    %1821 = vmatprep.subr.mxu0 0.0
    %1822 = vmatpush1.msra.mxu0 %v1700
    %1823 = vmatprep.subr.mxu0 0.0
    %1824 = vmatpush1.msra.mxu0 %v1701
    %1825 = vmatprep.subr.mxu0 0.0
    %1826 = vmatpush1.msra.mxu0 %v1702
    %1827 = vmatprep.subr.mxu0 0.0
    %1828 = vmatpush1.msra.mxu0 0.0
    %1829 = vmatprep.subr.mxu0 0.0
    %1830 = vmatpush1.msra.mxu0 0.0
    %1831 = vmatprep.subr.mxu0 0.0
    %1832 = vmatpush1.msra.mxu0 0.0
    %1833 = vmatprep.subr.mxu0 0.0
    %1834 = vmatpush1.msra.mxu0 0.0
    %1835 = vmatprep.subr.mxu0 0.0
    %1836 = vmatpush1.msra.mxu0 0.0
    %1837 = vmatprep.subr.mxu0 0.0
    %1838 = vmatpush1.msra.mxu0 0.0
    %1839 = vmatprep.subr.mxu0 0.0
    %1840 = vmatpush1.msra.mxu0 0.0
    %1841 = vmatprep.subr.mxu0 0.0
    %1842 = vmatpush1.msra.mxu0 0.0
    %1843 = vmatprep.subr.mxu0 0.0
    %1844 = vmatpush1.msra.mxu0 0.0
    %1845 = vmatprep.subr.mxu0 0.0
    %1846 = vmatpush1.msra.mxu0 0.0
    %1847 = vmatprep.subr.mxu0 0.0
    %1848 = vmatpush1.msra.mxu0 0.0
    %1849 = vmatprep.subr.mxu0 0.0
    %1850 = vmatpush1.msra.mxu0 0.0
    %1851 = vmatprep.subr.mxu0 0.0
    %1852 = vmatpush1.msra.mxu0 0.0
    %1853 = vmatprep.subr.mxu0 0.0
    %1854 = vmatpush1.msra.mxu0 0.0
    %1855 = vmatprep.subr.mxu0 0.0
    %1856 = vmatpush1.msra.mxu0 0.0
    %1857 = vmatprep.subr.mxu0 0.0
    %1858 = vmatpush1.msra.mxu0 0.0
    %1859 = vmatprep.mubr.f32.mxu0 0.0
    %1860 = vmatmul.mubr.f32.gmra.mrb[0].mxu0 %v1314
    %v1861 = vpop.f32.mrb[0].mxu0
    %v1862 = vadd.f32 %v1787, %v1861
    %v1863 = vpop.f32.mrb[0].mxu0
    %1864 = vmatprep.mubr.f32.mxu0 0.0
    %1865 = vmatmul.mubr.f32.gmra.mrb[0].mxu0 %v1315
    %v1866 = vpop.f32.mrb[0].mxu0
    %v1867 = vadd.f32 %v1792, %v1866
    %v1868 = vpop.f32.mrb[0].mxu0
    %1869 = vdwg.mxu0
    %s1870 = scalar_lea.vmem %s10, 2
    %v1871 = vld [vmem:[%s1870] sm:$0x1]
    %v1873 = vlaneseq
    %v1874 = vshrl.u32 %v1873, 7
    %v1875 = vsub.s32 0, %v1874
    %v1876 = vrot.slane %v1871, %v1875
    %v1878 = vadd.f32 %v1862, %v1876
    %v1879 = vadd.f32 %v1867, %v1876
    %v1880 = vmax.f32 %v1878, 0.0
    %v1881 = vmax.f32 %v1879, 0.0
    %v1883 = vsel %vm362, %v156, 0
    %1885 = vmatprep.subr.mxu0 0.0
    %1886 = vmatpush1.msra.mxu0 %v1880
    %1887 = vmatprep.subr.mxu0 0.0
    %1888 = vmatpush1.msra.mxu0 %v1881
    %1889 = vmatprep.subr.mxu0 0.0
    %1890 = vmatpush1.msra.mxu0 0.0
    %1891 = vmatprep.subr.mxu0 0.0
    %1892 = vmatpush1.msra.mxu0 0.0
    %1893 = vmatprep.subr.mxu0 0.0
    %1894 = vmatpush1.msra.mxu0 0.0
    %1895 = vmatprep.subr.mxu0 0.0
    %1896 = vmatpush1.msra.mxu0 0.0
    %1897 = vmatprep.subr.mxu0 0.0
    %1898 = vmatpush1.msra.mxu0 0.0
    %1899 = vmatprep.subr.mxu0 0.0
    %1900 = vmatpush1.msra.mxu0 0.0
    %1901 = vmatprep.subr.mxu0 0.0
    %1902 = vmatpush1.msra.mxu0 0.0
    %1903 = vmatprep.subr.mxu0 0.0
    %1904 = vmatpush1.msra.mxu0 0.0
    %1905 = vmatprep.subr.mxu0 0.0
    %1906 = vmatpush1.msra.mxu0 0.0
    %1907 = vmatprep.subr.mxu0 0.0
    %1908 = vmatpush1.msra.mxu0 0.0
    %1909 = vmatprep.subr.mxu0 0.0
    %1910 = vmatpush1.msra.mxu0 0.0
    %1911 = vmatprep.subr.mxu0 0.0
    %1912 = vmatpush1.msra.mxu0 0.0
    %1913 = vmatprep.subr.mxu0 0.0
    %1914 = vmatpush1.msra.mxu0 0.0
    %1915 = vmatprep.subr.mxu0 0.0
    %1916 = vmatpush1.msra.mxu0 0.0
    %1917 = vmatprep.subr.mxu0 0.0
    %1918 = vmatpush1.msra.mxu0 0.0
    %1919 = vmatprep.subr.mxu0 0.0
    %1920 = vmatpush1.msra.mxu0 0.0
    %1921 = vmatprep.subr.mxu0 0.0
    %1922 = vmatpush1.msra.mxu0 0.0
    %1923 = vmatprep.subr.mxu0 0.0
    %1924 = vmatpush1.msra.mxu0 0.0
    %1925 = vmatprep.subr.mxu0 0.0
    %1926 = vmatpush1.msra.mxu0 0.0
    %1927 = vmatprep.subr.mxu0 0.0
    %1928 = vmatpush1.msra.mxu0 0.0
    %1929 = vmatprep.subr.mxu0 0.0
    %1930 = vmatpush1.msra.mxu0 0.0
    %1931 = vmatprep.subr.mxu0 0.0
    %1932 = vmatpush1.msra.mxu0 0.0
    %1933 = vmatprep.subr.mxu0 0.0
    %1934 = vmatpush1.msra.mxu0 0.0
    %1935 = vmatprep.subr.mxu0 0.0
    %1936 = vmatpush1.msra.mxu0 0.0
    %1937 = vmatprep.subr.mxu0 0.0
    %1938 = vmatpush1.msra.mxu0 0.0
    %1939 = vmatprep.subr.mxu0 0.0
    %1940 = vmatpush1.msra.mxu0 0.0
    %1941 = vmatprep.subr.mxu0 0.0
    %1942 = vmatpush1.msra.mxu0 0.0
    %1943 = vmatprep.subr.mxu0 0.0
    %1944 = vmatpush1.msra.mxu0 0.0
    %1945 = vmatprep.subr.mxu0 0.0
    %1946 = vmatpush1.msra.mxu0 0.0
    %1947 = vmatprep.subr.mxu0 0.0
    %1948 = vmatpush1.msra.mxu0 0.0
    %1949 = vmatprep.mubr.f32.mxu0 0.0
    %1950 = vmatmul.mubr.f32.gmra.mrb[0].mxu0 %v1883
    %v1951 = vpop.f32.mrb[0].mxu0
    %v1952 = vadd.f32 0.0, %v1951
    %v1953 = vpop.f32.mrb[0].mxu0
    %1954 = vdwg.mxu0
    %v1955 = vmul.f32 %v1952, %v163
    %v1956 = vld [vmem:[%s11] sm:$0xff]
    %v1957 = vld [vmem:[%s11 + $0x8] sm:$0xff]
    %v1958 = vld [vmem:[%s11 + $0x10] sm:$0xff]
    %v1959 = vld [vmem:[%s11 + $0x18] sm:$0xff]
    %v1960 = vld [vmem:[%s11 + $0x20] sm:$0xff]
    %v1961 = vld [vmem:[%s11 + $0x28] sm:$0xff]
    %v1962 = vld [vmem:[%s11 + $0x30] sm:$0xff]
    %v1963 = vld [vmem:[%s11 + $0x38] sm:$0xff]
    %v1964 = vld [vmem:[%s11 + $0x40] sm:$0xff]
    %v1965 = vld [vmem:[%s11 + $0x48] sm:$0xff]
    %v1966 = vld [vmem:[%s11 + $0x50] sm:$0xff]
    %v1967 = vld [vmem:[%s11 + $0x58] sm:$0xff]
    %v1968 = vld [vmem:[%s11 + $0x60] sm:$0xff]
    %v1969 = vld [vmem:[%s11 + $0x68] sm:$0xff]
    %v1970 = vld [vmem:[%s11 + $0x70] sm:$0xff]
    %v1971 = vld [vmem:[%s11 + $0x78] sm:$0xff]
    %v1972 = vld [vmem:[%s12] sm:$0x1]
    %v1974 = vlaneseq
    %v1975 = vshrl.u32 %v1974, 7
    %v1976 = vsub.s32 0, %v1975
    %v1977 = vrot.slane %v1972, %v1976
    %1979 = vmatprep.subr.mxu0 0.0
    %1980 = vmatpush1.msra.mxu0 %v1956
    %1981 = vmatprep.subr.mxu0 0.0
    %1982 = vmatpush1.msra.mxu0 %v1957
    %1983 = vmatprep.subr.mxu0 0.0
    %1984 = vmatpush1.msra.mxu0 %v1958
    %1985 = vmatprep.subr.mxu0 0.0
    %1986 = vmatpush1.msra.mxu0 %v1959
    %1987 = vmatprep.subr.mxu0 0.0
    %1988 = vmatpush1.msra.mxu0 %v1960
    %1989 = vmatprep.subr.mxu0 0.0
    %1990 = vmatpush1.msra.mxu0 %v1961
    %1991 = vmatprep.subr.mxu0 0.0
    %1992 = vmatpush1.msra.mxu0 %v1962
    %1993 = vmatprep.subr.mxu0 0.0
    %1994 = vmatpush1.msra.mxu0 %v1963
    %1995 = vmatprep.subr.mxu0 0.0
    %1996 = vmatpush1.msra.mxu0 %v1964
    %1997 = vmatprep.subr.mxu0 0.0
    %1998 = vmatpush1.msra.mxu0 %v1965
    %1999 = vmatprep.subr.mxu0 0.0
    %2000 = vmatpush1.msra.mxu0 %v1966
    %2001 = vmatprep.subr.mxu0 0.0
    %2002 = vmatpush1.msra.mxu0 %v1967
    %2003 = vmatprep.subr.mxu0 0.0
    %2004 = vmatpush1.msra.mxu0 %v1968
    %2005 = vmatprep.subr.mxu0 0.0
    %2006 = vmatpush1.msra.mxu0 %v1969
    %2007 = vmatprep.subr.mxu0 0.0
    %2008 = vmatpush1.msra.mxu0 %v1970
    %2009 = vmatprep.subr.mxu0 0.0
    %2010 = vmatpush1.msra.mxu0 %v1971
    %2011 = vmatprep.subr.mxu0 0.0
    %2012 = vmatpush1.msra.mxu0 0.0
    %2013 = vmatprep.subr.mxu0 0.0
    %2014 = vmatpush1.msra.mxu0 0.0
    %2015 = vmatprep.subr.mxu0 0.0
    %2016 = vmatpush1.msra.mxu0 0.0
    %2017 = vmatprep.subr.mxu0 0.0
    %2018 = vmatpush1.msra.mxu0 0.0
    %2019 = vmatprep.subr.mxu0 0.0
    %2020 = vmatpush1.msra.mxu0 0.0
    %2021 = vmatprep.subr.mxu0 0.0
    %2022 = vmatpush1.msra.mxu0 0.0
    %2023 = vmatprep.subr.mxu0 0.0
    %2024 = vmatpush1.msra.mxu0 0.0
    %2025 = vmatprep.subr.mxu0 0.0
    %2026 = vmatpush1.msra.mxu0 0.0
    %2027 = vmatprep.subr.mxu0 0.0
    %2028 = vmatpush1.msra.mxu0 0.0
    %2029 = vmatprep.subr.mxu0 0.0
    %2030 = vmatpush1.msra.mxu0 0.0
    %2031 = vmatprep.subr.mxu0 0.0
    %2032 = vmatpush1.msra.mxu0 0.0
    %2033 = vmatprep.subr.mxu0 0.0
    %2034 = vmatpush1.msra.mxu0 0.0
    %2035 = vmatprep.subr.mxu0 0.0
    %2036 = vmatpush1.msra.mxu0 0.0
    %2037 = vmatprep.subr.mxu0 0.0
    %2038 = vmatpush1.msra.mxu0 0.0
    %2039 = vmatprep.subr.mxu0 0.0
    %2040 = vmatpush1.msra.mxu0 0.0
    %2041 = vmatprep.subr.mxu0 0.0
    %2042 = vmatpush1.msra.mxu0 0.0
    %2043 = vmatprep.mubr.f32.mxu0 0.0
    %2044 = vmatmul.mubr.f32.gmra.mrb[0].mxu0 %v1955
    %v2045 = vpop.f32.mrb[0].mxu0
    %v2046 = vadd.f32 %v1977, %v2045
    %v2047 = vpop.f32.mrb[0].mxu0
    %2048 = vdwg.mxu0
    %v2049 = vmax.f32 %v2046, 0.0
    %v2050 = vld [vmem:[%s13] sm:$0xff]
    %v2051 = vld [vmem:[%s13 + $0x8] sm:$0xff]
    %v2052 = vld [vmem:[%s13 + $0x10] sm:$0xff]
    %v2053 = vld [vmem:[%s13 + $0x18] sm:$0xff]
    %v2054 = vld [vmem:[%s13 + $0x20] sm:$0xff]
    %v2055 = vld [vmem:[%s13 + $0x28] sm:$0xff]
    %v2056 = vld [vmem:[%s13 + $0x30] sm:$0xff]
    %v2057 = vld [vmem:[%s13 + $0x38] sm:$0xff]
    %v2058 = vld [vmem:[%s13 + $0x40] sm:$0xff]
    %v2059 = vld [vmem:[%s13 + $0x48] sm:$0xff]
    %v2060 = vld [vmem:[%s13 + $0x50] sm:$0xff]
    %v2061 = vld [vmem:[%s13 + $0x58] sm:$0xff]
    %v2062 = vld [vmem:[%s13 + $0x60] sm:$0xff]
    %v2063 = vld [vmem:[%s13 + $0x68] sm:$0xff]
    %v2064 = vld [vmem:[%s13 + $0x70] sm:$0xff]
    %v2065 = vld [vmem:[%s13 + $0x78] sm:$0xff]
    %v2066 = vld [vmem:[%s14] sm:$0x1]
    %v2068 = vlaneseq
    %v2069 = vshrl.u32 %v2068, 7
    %v2070 = vsub.s32 0, %v2069
    %v2071 = vrot.slane %v2066, %v2070
    %2073 = vmatprep.subr.mxu0 0.0
    %2074 = vmatpush1.msra.mxu0 %v2050
    %2075 = vmatprep.subr.mxu0 0.0
    %2076 = vmatpush1.msra.mxu0 %v2051
    %2077 = vmatprep.subr.mxu0 0.0
    %2078 = vmatpush1.msra.mxu0 %v2052
    %2079 = vmatprep.subr.mxu0 0.0
    %2080 = vmatpush1.msra.mxu0 %v2053
    %2081 = vmatprep.subr.mxu0 0.0
    %2082 = vmatpush1.msra.mxu0 %v2054
    %2083 = vmatprep.subr.mxu0 0.0
    %2084 = vmatpush1.msra.mxu0 %v2055
    %2085 = vmatprep.subr.mxu0 0.0
    %2086 = vmatpush1.msra.mxu0 %v2056
    %2087 = vmatprep.subr.mxu0 0.0
    %2088 = vmatpush1.msra.mxu0 %v2057
    %2089 = vmatprep.subr.mxu0 0.0
    %2090 = vmatpush1.msra.mxu0 %v2058
    %2091 = vmatprep.subr.mxu0 0.0
    %2092 = vmatpush1.msra.mxu0 %v2059
    %2093 = vmatprep.subr.mxu0 0.0
    %2094 = vmatpush1.msra.mxu0 %v2060
    %2095 = vmatprep.subr.mxu0 0.0
    %2096 = vmatpush1.msra.mxu0 %v2061
    %2097 = vmatprep.subr.mxu0 0.0
    %2098 = vmatpush1.msra.mxu0 %v2062
    %2099 = vmatprep.subr.mxu0 0.0
    %2100 = vmatpush1.msra.mxu0 %v2063
    %2101 = vmatprep.subr.mxu0 0.0
    %2102 = vmatpush1.msra.mxu0 %v2064
    %2103 = vmatprep.subr.mxu0 0.0
    %2104 = vmatpush1.msra.mxu0 %v2065
    %2105 = vmatprep.subr.mxu0 0.0
    %2106 = vmatpush1.msra.mxu0 0.0
    %2107 = vmatprep.subr.mxu0 0.0
    %2108 = vmatpush1.msra.mxu0 0.0
    %2109 = vmatprep.subr.mxu0 0.0
    %2110 = vmatpush1.msra.mxu0 0.0
    %2111 = vmatprep.subr.mxu0 0.0
    %2112 = vmatpush1.msra.mxu0 0.0
    %2113 = vmatprep.subr.mxu0 0.0
    %2114 = vmatpush1.msra.mxu0 0.0
    %2115 = vmatprep.subr.mxu0 0.0
    %2116 = vmatpush1.msra.mxu0 0.0
    %2117 = vmatprep.subr.mxu0 0.0
    %2118 = vmatpush1.msra.mxu0 0.0
    %2119 = vmatprep.subr.mxu0 0.0
    %2120 = vmatpush1.msra.mxu0 0.0
    %2121 = vmatprep.subr.mxu0 0.0
    %2122 = vmatpush1.msra.mxu0 0.0
    %2123 = vmatprep.subr.mxu0 0.0
    %2124 = vmatpush1.msra.mxu0 0.0
    %2125 = vmatprep.subr.mxu0 0.0
    %2126 = vmatpush1.msra.mxu0 0.0
    %2127 = vmatprep.subr.mxu0 0.0
    %2128 = vmatpush1.msra.mxu0 0.0
    %2129 = vmatprep.subr.mxu0 0.0
    %2130 = vmatpush1.msra.mxu0 0.0
    %2131 = vmatprep.subr.mxu0 0.0
    %2132 = vmatpush1.msra.mxu0 0.0
    %2133 = vmatprep.subr.mxu0 0.0
    %2134 = vmatpush1.msra.mxu0 0.0
    %2135 = vmatprep.subr.mxu0 0.0
    %2136 = vmatpush1.msra.mxu0 0.0
    %2137 = vmatprep.mubr.f32.mxu0 0.0
    %2138 = vmatmul.mubr.f32.gmra.mrb[0].mxu0 %v2049
    %v2139 = vpop.f32.mrb[0].mxu0
    %v2140 = vadd.f32 %v2071, %v2139
    %v2141 = vpop.f32.mrb[0].mxu0
    %2142 = vdwg.mxu0
    %2143 = vst [vmem:[%s15] sm:$0x3] %v2140
    // Predicated region
    $region78: #{_lambda_.1} parent=1 // pred_check
      _
    $region79: #{_lambda_.1} parent=1 // pred_check_branch
      %2145 = sbr.rel (0) target = $region81
    $region80: #{_lambda_.1} parent=1 // pred_region
      _
    $region81: #{_lambda_.1} parent=1 // pred_fallthru
      _
    // Predicated region
    $region82: #{_lambda_.1} parent=1 // pred_check
      _
    $region83: #{_lambda_.1} parent=1 // pred_check_branch
      %2147 = sbr.rel (0) target = $region85
    $region84: #{_lambda_.1} parent=1 // pred_region
      _
    $region85: #{_lambda_.1} parent=1 // pred_fallthru
      _
    %2148 = vsyncpa [#allocation3], 1
    %2149 = vsyncpa [#allocation5], 1
    %2150 = vsyncpa [#allocation8], 1

</llo_original>
